<compile_context>
chip_gen: v6e
topology: v6e:2x2x1
jax: 0.10.0
libtpu: 0.0.40
codegen_flags: <defaults>
</compile_context>

<pallas_src>
import functools
import math

import jax
import jax.numpy as jnp
from jax.experimental import pallas as pl
from jax.experimental.pallas import tpu as pltpu

LN_EPS = 1e-5
NEG_INF = -10000.0


def gelu(x):
    return 0.5 * x * (1.0 + jnp.tanh(math.sqrt(2.0 / math.pi) * (x + 0.044715 * x ** 3)))


def _layer_norm(x, gamma, beta):
    mu = jnp.mean(x, axis=-1, keepdims=True)
    var = jnp.mean((x - mu) ** 2, axis=-1, keepdims=True)
    return (x - mu) * jax.lax.rsqrt(var + LN_EPS) * gamma + beta


# ----------------------------------------------------------------------------
# helpers
# ----------------------------------------------------------------------------
def _vmem_limit_bytes():
    """Per-generation scoped-VMEM budget (v7x: 64 MiB physical, v5e/v6e: 128)."""
    try:
        cap = int(pltpu.get_tpu_info().vmem_capacity_bytes)
    except Exception:
        return 40 * 1024 * 1024  # conservative fallback, fits v7x
    return max(32 * 1024 * 1024, min(int(cap * 0.65), 100 * 1024 * 1024))


def _const_spec(shape):
    """Grid-invariant array: constant index_map + single-buffered (no point
    double-buffering data that never changes across the grid)."""
    index_map = lambda *_: (0,) * len(shape)
    try:
        return pl.BlockSpec(shape, index_map, pipeline_mode=pl.Buffered(1))
    except Exception:  # jax version without pipeline_mode on BlockSpec
        return pl.BlockSpec(shape, index_map)


def _row_tile(n_rows, target=256):
    """Largest row-tile <= target that divides n_rows (multiple of 8)."""
    if n_rows <= target:
        return n_rows
    for tm in range(target, 7, -1):
        if n_rows % tm == 0 and tm % 8 == 0:
            return tm
    return n_rows


# ----------------------------------------------------------------------------
# kernel 1: ln_1 + c_attn (QKV projection), row-tiled
# ----------------------------------------------------------------------------
def _ln_qkv_kernel(x_ref, g1_ref, b1_ref, wqkv_ref, bqkv_ref, qkv_ref):
    x = x_ref[...].astype(jnp.float32)                       # (TM, nx)
    ln1 = _layer_norm(x, g1_ref[0], b1_ref[0])
    qkv = jnp.dot(ln1.astype(jnp.bfloat16), wqkv_ref[...],
                  preferred_element_type=jnp.float32) + bqkv_ref[0]
    qkv_ref[...] = qkv.astype(qkv_ref.dtype)


def _ln_qkv(x2, g1, b1, wqkv, bqkv, *, row_tile=256):
    n_rows, nx = x2.shape
    tm = _row_tile(n_rows, row_tile)
    return pl.pallas_call(
        _ln_qkv_kernel,
        out_shape=jax.ShapeDtypeStruct((n_rows, 3 * nx), jnp.float32),
        grid_spec=pltpu.PrefetchScalarGridSpec(
            num_scalar_prefetch=0,
            grid=(n_rows // tm,),
            in_specs=[
                pl.BlockSpec((tm, nx), lambda i: (i, 0)),
                _const_spec((1, nx)), _const_spec((1, nx)),
                _const_spec((nx, 3 * nx)), _const_spec((1, 3 * nx)),
            ],
            out_specs=pl.BlockSpec((tm, 3 * nx), lambda i: (i, 0)),
        ),
        compiler_params=pltpu.CompilerParams(
            dimension_semantics=("parallel",),
            vmem_limit_bytes=_vmem_limit_bytes()),
    )(x2, g1, b1, wqkv, bqkv)


# ----------------------------------------------------------------------------
# kernel 2: causal attention, one grid step per (batch, head)
# ----------------------------------------------------------------------------
def _attn_head_kernel(mask_ref, q_ref, k_ref, v_ref, o_ref, *, scale):
    q = q_ref[0, 0].astype(jnp.bfloat16)                     # (T, hd)
    k = k_ref[0, 0].astype(jnp.bfloat16)                     # (T, hd)
    v = v_ref[0, 0].astype(jnp.bfloat16)                     # (T, hd)
    # scores q @ k^T  (no key transpose needed: contract over last dims)
    s = jnp.einsum('td,sd->ts', q, k, preferred_element_type=jnp.float32)
    if scale:  # module default scale=False
        s = s * (1.0 / math.sqrt(q.shape[-1]))
    # causal mask: single select (mask precomputed in wrapper, single-buffered)
    s = jnp.where(mask_ref[...] > 0.5, s, NEG_INF)
    # softmax over last dim, f32, exact divide (precision over approx recip)
    s = s - jnp.max(s, axis=-1, keepdims=True)
    e = jnp.exp(s)
    p = e / jnp.sum(e, axis=-1, keepdims=True)
    o = jnp.dot(p.astype(jnp.bfloat16), v, preferred_element_type=jnp.float32)
    o_ref[0, 0] = o.astype(o_ref.dtype)


def _attention(qh, kh, vh, *, scale=False):
    B, H, T, hd = qh.shape
    mask = jnp.tril(jnp.ones((T, T), jnp.float32))           # hoisted causal mask
    head_spec = pl.BlockSpec((1, 1, T, hd), lambda b, h: (b, h, 0, 0))
    return pl.pallas_call(
        functools.partial(_attn_head_kernel, scale=scale),
        out_shape=jax.ShapeDtypeStruct((B, H, T, hd), jnp.float32),
        grid_spec=pltpu.PrefetchScalarGridSpec(
            num_scalar_prefetch=0,
            grid=(B, H),
            in_specs=[_const_spec((T, T)), head_spec, head_spec, head_spec],
            out_specs=pl.BlockSpec((1, 1, T, hd), lambda b, h: (b, h, 0, 0)),
        ),
        compiler_params=pltpu.CompilerParams(
            # two parallel axes -> both v7x TensorCores busy even for B=1
            dimension_semantics=("parallel", "parallel"),
            vmem_limit_bytes=_vmem_limit_bytes()),
    )(mask, qh, kh, vh)


# ----------------------------------------------------------------------------
# kernel 3: c_proj + residual + ln_2 + MLP + residual, row-tiled
# ----------------------------------------------------------------------------
def _proj_mlp_kernel(a_ref, x_ref, wpr_ref, bpr_ref, g2_ref, b2_ref,
                     wfc_ref, bfc_ref, wp2_ref, bp2_ref, y_ref):
    a = a_ref[...].astype(jnp.bfloat16)                      # merged attn (TM, nx)
    x = x_ref[...].astype(jnp.float32)                       # residual path (TM, nx)
    proj = jnp.dot(a, wpr_ref[...], preferred_element_type=jnp.float32) + bpr_ref[0]
    x = x + proj                                             # residual 1
    ln2 = _layer_norm(x, g2_ref[0], b2_ref[0])
    h = gelu(jnp.dot(ln2.astype(jnp.bfloat16), wfc_ref[...],
                     preferred_element_type=jnp.float32) + bfc_ref[0])
    h2 = jnp.dot(h.astype(jnp.bfloat16), wp2_ref[...],
                 preferred_element_type=jnp.float32) + bp2_ref[0]
    y_ref[...] = (x + h2).astype(y_ref.dtype)                # residual 2


def _proj_mlp(a2, x2, wpr, bpr, g2, b2, wfc, bfc, wp2, bp2, *, row_tile=256):
    n_rows, nx = x2.shape
    tm = _row_tile(n_rows, row_tile)
    row_spec = lambda cols: pl.BlockSpec((tm, cols), lambda i: (i, 0))
    return pl.pallas_call(
        _proj_mlp_kernel,
        out_shape=jax.ShapeDtypeStruct((n_rows, nx), x2.dtype),
        grid_spec=pltpu.PrefetchScalarGridSpec(
            num_scalar_prefetch=0,
            grid=(n_rows // tm,),
            in_specs=[
                row_spec(nx), row_spec(nx),
                _const_spec((nx, nx)), _const_spec((1, nx)),
                _const_spec((1, nx)), _const_spec((1, nx)),
                _const_spec((nx, 4 * nx)), _const_spec((1, 4 * nx)),
                _const_spec((4 * nx, nx)), _const_spec((1, nx)),
            ],
            out_specs=row_spec(nx),
        ),
        compiler_params=pltpu.CompilerParams(
            dimension_semantics=("parallel",),
            vmem_limit_bytes=_vmem_limit_bytes()),
    )(a2, x2, wpr, bpr, g2, b2, wfc, bfc, wp2, bp2)


# ----------------------------------------------------------------------------
# forward
# ----------------------------------------------------------------------------
def prepare_params(params):
    """Cast the big matmul weights to bf16 ONCE (hoisted out of the forward)."""
    (g1, b1, wqkv, bqkv, wpr, bpr, g2, b2, wfc, bfc, wp2, bp2) = params
    return (g1, b1, wqkv.astype(jnp.bfloat16), bqkv,
            wpr.astype(jnp.bfloat16), bpr, g2, b2,
            wfc.astype(jnp.bfloat16), bfc, wp2.astype(jnp.bfloat16), bp2)


@functools.partial(jax.jit, static_argnames=("n_head", "scale"))
def block_forward(x, params, n_head, scale=False):
    (g1, b1, wqkv, bqkv, wpr, bpr, g2, b2, wfc, bfc, wp2, bp2) = params
    B, T, nx = x.shape
    hd = nx // n_head
    x2 = x.reshape(B * T, nx)

    # (1) ln_1 + c_attn : row-tiled, wqkv resident & single-buffered
    qkv = _ln_qkv(x2, g1, b1, wqkv, bqkv)

    # head split OUTSIDE the kernels (cheap XLA relayout; kernels stay lane-major)
    q, k, v = jnp.split(qkv.reshape(B, T, 3 * nx), 3, axis=-1)
    qh = q.reshape(B, T, n_head, hd).transpose(0, 2, 1, 3)   # (B, H, T, hd)
    kh = k.reshape(B, T, n_head, hd).transpose(0, 2, 1, 3)
    vh = v.reshape(B, T, n_head, hd).transpose(0, 2, 1, 3)

    # (2) causal attention per (batch, head)
    ah = _attention(qh, kh, vh, scale=scale)                 # (B, H, T, hd)

    # merge heads outside the kernel
    a2 = ah.transpose(0, 2, 1, 3).reshape(B * T, nx)

    # (3) c_proj + residual + ln_2 + MLP + residual
    y = _proj_mlp(a2, x2, wpr, bpr, g2, b2, wfc, bfc, wp2, bp2).reshape(B, T, nx)

    present = jnp.stack([kh, vh], axis=0)                    # (2, B, H, T, hd)
    return y, present


# ---- pure-JAX reference (mm_dtype controls the matmul-operand precision) ----
def block_reference(x, params, n_head, mm_dtype=jnp.float32):
    (g1, b1, wqkv, bqkv, wpr, bpr, g2, b2, wfc, bfc, wp2, bp2) = params
    B, T, nx = x.shape
    hd = nx // n_head

    def mm(a, b):
        return jnp.dot(a.astype(mm_dtype), b.astype(mm_dtype),
                       preferred_element_type=jnp.float32)

    ln1 = _layer_norm(x, g1[0], b1[0])
    qkv = mm(ln1.reshape(B * T, nx), wqkv).reshape(B, T, 3 * nx) + bqkv[0]
    q, k, v = jnp.split(qkv, 3, axis=-1)
    qh = q.reshape(B, T, n_head, hd).transpose(0, 2, 1, 3)
    kh = k.reshape(B, T, n_head, hd).transpose(0, 2, 1, 3)
    vh = v.reshape(B, T, n_head, hd).transpose(0, 2, 1, 3)
    w = jnp.einsum('bhtd,bhsd->bhts', qh.astype(mm_dtype), kh.astype(mm_dtype),
                   preferred_element_type=jnp.float32)
    mask = jnp.tril(jnp.ones((T, T), jnp.float32))
    w = w * mask - 10000.0 * (1.0 - mask)
    p = jax.nn.softmax(w, axis=-1)
    a = jnp.einsum('bhts,bhsd->bhtd', p.astype(mm_dtype), vh.astype(mm_dtype),
                   preferred_element_type=jnp.float32)
    a = a.transpose(0, 2, 1, 3).reshape(B, T, nx)
    a = mm(a.reshape(B * T, nx), wpr).reshape(B, T, nx) + bpr[0]
    x = x + a
    ln2 = _layer_norm(x, g2[0], b2[0])
    h = gelu(mm(ln2.reshape(B * T, nx), wfc).reshape(B, T, 4 * nx) + bfc[0])
    h2 = mm(h.reshape(B * T, 4 * nx), wp2).reshape(B, T, nx) + bp2[0]
    y = x + h2
    present = jnp.stack([kh, vh], axis=0)   # (2, B, H, T, hd)
    return y, present


if __name__ == "__main__":
    # small shapes consistent with the module (n_ctx=T=8, n_embd=32, n_head=4)
    B, T, NX, NHEAD = 2, 8, 32, 4

    key = jax.random.PRNGKey(0)
    ks = jax.random.split(key, 8)

    x = jax.random.normal(ks[0], (B, T, NX), jnp.float32)

    g1 = jnp.ones((1, NX), jnp.float32)
    b1 = jnp.zeros((1, NX), jnp.float32)
    wqkv = 0.02 * jax.random.normal(ks[1], (NX, 3 * NX), jnp.float32)
    bqkv = jnp.zeros((1, 3 * NX), jnp.float32)
    wpr = 0.02 * jax.random.normal(ks[2], (NX, NX), jnp.float32)
    bpr = jnp.zeros((1, NX), jnp.float32)
    g2 = jnp.ones((1, NX), jnp.float32)
    b2 = jnp.zeros((1, NX), jnp.float32)
    wfc = 0.02 * jax.random.normal(ks[3], (NX, 4 * NX), jnp.float32)
    bfc = jnp.zeros((1, 4 * NX), jnp.float32)
    wp2 = 0.02 * jax.random.normal(ks[4], (4 * NX, NX), jnp.float32)
    bp2 = jnp.zeros((1, NX), jnp.float32)

    params_f32 = (g1, b1, wqkv, bqkv, wpr, bpr, g2, b2, wfc, bfc, wp2, bp2)
    params = prepare_params(params_f32)   # bf16 weight cast, done once at init

    y, present = jax.block_until_ready(block_forward(x, params, n_head=NHEAD))

    assert y.shape == (B, T, NX)
    assert present.shape == (2, B, NHEAD, T, NX // NHEAD)

    # tight check vs a reference using the same bf16 matmul boundaries
    y_bf, present_bf = block_reference(x, params_f32, NHEAD, mm_dtype=jnp.bfloat16)
    assert jnp.allclose(y, y_bf, atol=2e-3, rtol=2e-3), "mismatch vs bf16-matched reference"
    assert jnp.allclose(present, present_bf, atol=2e-3, rtol=2e-3), "present mismatch"

    # looser check vs the pure-f32 reference (only bf16 MXU rounding differs)
    y_f32, _ = block_reference(x, params_f32, NHEAD, mm_dtype=jnp.float32)
    assert jnp.allclose(y, y_f32, atol=1e-2, rtol=1e-2), "mismatch vs f32 reference"

    print("KERNEL_OK")
</pallas_src>

<mosaic_0001>
module attributes {stable_mosaic.version = 11 : i64} {
  func.func @_ln_qkv_kernel(%arg0: i32, %arg1: memref<16x32xf32, #tpu.memory_space<vmem>>, %arg2: memref<1x32xf32, #tpu.memory_space<vmem>>, %arg3: memref<1x32xf32, #tpu.memory_space<vmem>>, %arg4: memref<32x96xbf16, #tpu.memory_space<vmem>>, %arg5: memref<1x96xf32, #tpu.memory_space<vmem>>, %arg6: memref<16x96xf32, #tpu.memory_space<vmem>>) attributes {dimension_semantics = [#tpu.dimension_semantics<parallel>], iteration_bounds = array<i64: 1>, scalar_prefetch = 0 : i64, scratch_operands = 0 : i64, tpu.core_type = #tpu.core_type<tc>, window_params = [{transform_indices = @transform_0, window_bounds = array<i64: 16, 32>}, {pipeline_mode = #tpu.pipeline_mode<synchronous>, transform_indices = @transform_1, window_bounds = array<i64: 1, 32>}, {pipeline_mode = #tpu.pipeline_mode<synchronous>, transform_indices = @transform_2, window_bounds = array<i64: 1, 32>}, {pipeline_mode = #tpu.pipeline_mode<synchronous>, transform_indices = @transform_3, window_bounds = array<i64: 32, 96>}, {pipeline_mode = #tpu.pipeline_mode<synchronous>, transform_indices = @transform_4, window_bounds = array<i64: 1, 96>}, {transform_indices = @transform_5, window_bounds = array<i64: 16, 96>}]} {
    %c0 = arith.constant 0 : index
    %c0_0 = arith.constant 0 : index
    %0 = vector.load %arg1[%c0, %c0_0] : memref<16x32xf32, #tpu.memory_space<vmem>>, vector<16x32xf32>
    %c0_1 = arith.constant 0 : index
    %c0_2 = arith.constant 0 : index
    %1 = vector.load %arg2[%c0_1, %c0_2] : memref<1x32xf32, #tpu.memory_space<vmem>>, vector<1x32xf32>
    %2 = vector.shape_cast %1 : vector<1x32xf32> to vector<32xf32>
    %c0_3 = arith.constant 0 : index
    %c0_4 = arith.constant 0 : index
    %3 = vector.load %arg3[%c0_3, %c0_4] : memref<1x32xf32, #tpu.memory_space<vmem>>, vector<1x32xf32>
    %4 = vector.shape_cast %3 : vector<1x32xf32> to vector<32xf32>
    %cst = arith.constant dense<0.000000e+00> : vector<16xf32>
    %5 = vector.multi_reduction <add>, %0, %cst [1] : vector<16x32xf32> to vector<16xf32>
    %6 = vector.shape_cast %5 : vector<16xf32> to vector<16x1xf32>
    %cst_5 = arith.constant 3.200000e+01 : f32
    %7 = vector.broadcast %cst_5 : f32 to vector<16x1xf32>
    %8 = arith.divf %6, %7 : vector<16x1xf32>
    %9 = vector.broadcast %8 : vector<16x1xf32> to vector<16x32xf32>
    %10 = arith.subf %0, %9 : vector<16x32xf32>
    %11 = arith.mulf %10, %10 : vector<16x32xf32>
    %cst_6 = arith.constant dense<0.000000e+00> : vector<16xf32>
    %12 = vector.multi_reduction <add>, %11, %cst_6 [1] : vector<16x32xf32> to vector<16xf32>
    %13 = vector.shape_cast %12 : vector<16xf32> to vector<16x1xf32>
    %cst_7 = arith.constant 3.200000e+01 : f32
    %14 = vector.broadcast %cst_7 : f32 to vector<16x1xf32>
    %15 = arith.divf %13, %14 : vector<16x1xf32>
    %16 = vector.broadcast %8 : vector<16x1xf32> to vector<16x32xf32>
    %17 = arith.subf %0, %16 : vector<16x32xf32>
    %cst_8 = arith.constant 9.99999974E-6 : f32
    %18 = vector.broadcast %cst_8 : f32 to vector<16x1xf32>
    %19 = arith.addf %15, %18 : vector<16x1xf32>
    %20 = math.rsqrt %19 : vector<16x1xf32>
    %21 = vector.broadcast %20 : vector<16x1xf32> to vector<16x32xf32>
    %22 = arith.mulf %17, %21 : vector<16x32xf32>
    %23 = vector.shape_cast %2 : vector<32xf32> to vector<1x32xf32>
    %24 = vector.broadcast %23 : vector<1x32xf32> to vector<16x32xf32>
    %25 = arith.mulf %22, %24 : vector<16x32xf32>
    %26 = vector.shape_cast %4 : vector<32xf32> to vector<1x32xf32>
    %27 = vector.broadcast %26 : vector<1x32xf32> to vector<16x32xf32>
    %28 = arith.addf %25, %27 : vector<16x32xf32>
    %29 = arith.truncf %28 : vector<16x32xf32> to vector<16x32xbf16>
    %c0_9 = arith.constant 0 : index
    %c0_10 = arith.constant 0 : index
    %30 = vector.load %arg4[%c0_9, %c0_10] : memref<32x96xbf16, #tpu.memory_space<vmem>>, vector<32x96xbf16>
    %cst_11 = arith.constant dense<0.000000e+00> : vector<16x96xf32>
    %31 = tpu.matmul %29, %30, %cst_11 {dimension_numbers = #tpu.dot_dimension_numbers<[1], [0], [0], [1], [0, 0, 1, 1], [], []>} : vector<16x32xbf16>, vector<32x96xbf16>, vector<16x96xf32> -> vector<16x96xf32>
    %c0_12 = arith.constant 0 : index
    %c0_13 = arith.constant 0 : index
    %32 = vector.load %arg5[%c0_12, %c0_13] : memref<1x96xf32, #tpu.memory_space<vmem>>, vector<1x96xf32>
    %33 = vector.shape_cast %32 : vector<1x96xf32> to vector<96xf32>
    %34 = vector.shape_cast %33 : vector<96xf32> to vector<1x96xf32>
    %35 = vector.broadcast %34 : vector<1x96xf32> to vector<16x96xf32>
    %36 = arith.addf %31, %35 : vector<16x96xf32>
    %c0_14 = arith.constant 0 : index
    %c0_15 = arith.constant 0 : index
    %37 = vector.load %arg6[%c0_14, %c0_15] : memref<16x96xf32, #tpu.memory_space<vmem>>, vector<16x96xf32>
    tpu.vector_store %arg6[%c0_14, %c0_15], %36 {strides = array<i32>} : memref<16x96xf32, #tpu.memory_space<vmem>>, vector<16x96xf32>,
    return
  }
  func.func @transform_0(%arg0: i32) -> (i32, i32) {
    %c0_i32 = arith.constant 0 : i32
    %c0_i32_0 = arith.constant 0 : i32
    return %arg0, %c0_i32 : i32, i32
  }
  func.func @transform_1(%arg0: i32) -> (i32, i32) {
    %c0_i32 = arith.constant 0 : i32
    %c0_i32_0 = arith.constant 0 : i32
    %c0_i32_1 = arith.constant 0 : i32
    return %c0_i32, %c0_i32_0 : i32, i32
  }
  func.func @transform_2(%arg0: i32) -> (i32, i32) {
    %c0_i32 = arith.constant 0 : i32
    %c0_i32_0 = arith.constant 0 : i32
    %c0_i32_1 = arith.constant 0 : i32
    return %c0_i32, %c0_i32_0 : i32, i32
  }
  func.func @transform_3(%arg0: i32) -> (i32, i32) {
    %c0_i32 = arith.constant 0 : i32
    %c0_i32_0 = arith.constant 0 : i32
    %c0_i32_1 = arith.constant 0 : i32
    return %c0_i32, %c0_i32_0 : i32, i32
  }
  func.func @transform_4(%arg0: i32) -> (i32, i32) {
    %c0_i32 = arith.constant 0 : i32
    %c0_i32_0 = arith.constant 0 : i32
    %c0_i32_1 = arith.constant 0 : i32
    return %c0_i32, %c0_i32_0 : i32, i32
  }
  func.func @transform_5(%arg0: i32) -> (i32, i32) {
    %c0_i32 = arith.constant 0 : i32
    %c0_i32_0 = arith.constant 0 : i32
    return %arg0, %c0_i32 : i32, i32
  }
}

module attributes {stable_mosaic.version = 11 : i64} {
  func.func @_attn_head_kernel(%arg0: i32, %arg1: i32, %arg2: memref<8x8xf32, #tpu.memory_space<vmem>>, %arg3: memref<1x1x8x8xf32, #tpu.memory_space<vmem>>, %arg4: memref<1x1x8x8xf32, #tpu.memory_space<vmem>>, %arg5: memref<1x1x8x8xf32, #tpu.memory_space<vmem>>, %arg6: memref<1x1x8x8xf32, #tpu.memory_space<vmem>>) attributes {dimension_semantics = [#tpu.dimension_semantics<parallel>, #tpu.dimension_semantics<parallel>], iteration_bounds = array<i64: 2, 4>, scalar_prefetch = 0 : i64, scratch_operands = 0 : i64, tpu.core_type = #tpu.core_type<tc>, window_params = [{pipeline_mode = #tpu.pipeline_mode<synchronous>, transform_indices = @transform_0, window_bounds = array<i64: 8, 8>}, {transform_indices = @transform_1, window_bounds = array<i64: 1, 1, 8, 8>}, {transform_indices = @transform_2, window_bounds = array<i64: 1, 1, 8, 8>}, {transform_indices = @transform_3, window_bounds = array<i64: 1, 1, 8, 8>}, {transform_indices = @transform_4, window_bounds = array<i64: 1, 1, 8, 8>}]} {
    %c0 = arith.constant 0 : index
    %c0_0 = arith.constant 0 : index
    %c0_1 = arith.constant 0 : index
    %c0_2 = arith.constant 0 : index
    %0 = vector.load %arg3[%c0, %c0_0, %c0_1, %c0_2] : memref<1x1x8x8xf32, #tpu.memory_space<vmem>>, vector<1x1x8x8xf32>
    %1 = vector.shape_cast %0 : vector<1x1x8x8xf32> to vector<8x8xf32>
    %2 = arith.truncf %1 : vector<8x8xf32> to vector<8x8xbf16>
    %c0_3 = arith.constant 0 : index
    %c0_4 = arith.constant 0 : index
    %c0_5 = arith.constant 0 : index
    %c0_6 = arith.constant 0 : index
    %3 = vector.load %arg4[%c0_3, %c0_4, %c0_5, %c0_6] : memref<1x1x8x8xf32, #tpu.memory_space<vmem>>, vector<1x1x8x8xf32>
    %4 = vector.shape_cast %3 : vector<1x1x8x8xf32> to vector<8x8xf32>
    %5 = arith.truncf %4 : vector<8x8xf32> to vector<8x8xbf16>
    %c0_7 = arith.constant 0 : index
    %c0_8 = arith.constant 0 : index
    %c0_9 = arith.constant 0 : index
    %c0_10 = arith.constant 0 : index
    %6 = vector.load %arg5[%c0_7, %c0_8, %c0_9, %c0_10] : memref<1x1x8x8xf32, #tpu.memory_space<vmem>>, vector<1x1x8x8xf32>
    %7 = vector.shape_cast %6 : vector<1x1x8x8xf32> to vector<8x8xf32>
    %8 = arith.truncf %7 : vector<8x8xf32> to vector<8x8xbf16>
    "tpu.trace_start"() <{level = 10 : i32, message = "td,sd->ts"}> : () -> ()
    %cst = arith.constant dense<0.000000e+00> : vector<8x8xf32>
    %9 = tpu.matmul %2, %5, %cst {dimension_numbers = #tpu.dot_dimension_numbers<[1], [1], [0], [0], [0, 0, 1, 0], [], []>} : vector<8x8xbf16>, vector<8x8xbf16>, vector<8x8xf32> -> vector<8x8xf32>
    "tpu.trace_stop"() : () -> ()
    %c0_11 = arith.constant 0 : index
    %c0_12 = arith.constant 0 : index
    %10 = vector.load %arg2[%c0_11, %c0_12] : memref<8x8xf32, #tpu.memory_space<vmem>>, vector<8x8xf32>
    %cst_13 = arith.constant 5.000000e-01 : f32
    %11 = vector.broadcast %cst_13 : f32 to vector<8x8xf32>
    %12 = arith.cmpf ogt, %10, %11 : vector<8x8xf32>
    %cst_14 = arith.constant -1.000000e+04 : f32
    %13 = vector.broadcast %cst_14 : f32 to vector<8x8xf32>
    %14 = arith.select %12, %9, %13 : vector<8x8xi1>, vector<8x8xf32>
    %cst_15 = arith.constant dense<0xFF800000> : vector<8xf32>
    %15 = vector.multi_reduction <maximumf>, %14, %cst_15 [1] : vector<8x8xf32> to vector<8xf32>
    %16 = vector.shape_cast %15 : vector<8xf32> to vector<8x1xf32>
    %17 = vector.broadcast %16 : vector<8x1xf32> to vector<8x8xf32>
    %18 = arith.subf %14, %17 : vector<8x8xf32>
    %19 = math.exp %18 : vector<8x8xf32>
    %cst_16 = arith.constant dense<0.000000e+00> : vector<8xf32>
    %20 = vector.multi_reduction <add>, %19, %cst_16 [1] : vector<8x8xf32> to vector<8xf32>
    %21 = vector.shape_cast %20 : vector<8xf32> to vector<8x1xf32>
    %22 = vector.broadcast %21 : vector<8x1xf32> to vector<8x8xf32>
    %23 = arith.divf %19, %22 : vector<8x8xf32>
    %24 = arith.truncf %23 : vector<8x8xf32> to vector<8x8xbf16>
    %cst_17 = arith.constant dense<0.000000e+00> : vector<8x8xf32>
    %25 = tpu.matmul %24, %8, %cst_17 {dimension_numbers = #tpu.dot_dimension_numbers<[1], [0], [0], [1], [0, 0, 1, 1], [], []>} : vector<8x8xbf16>, vector<8x8xbf16>, vector<8x8xf32> -> vector<8x8xf32>
    %c0_18 = arith.constant 0 : index
    %c0_19 = arith.constant 0 : index
    %c0_20 = arith.constant 0 : index
    %c0_21 = arith.constant 0 : index
    %26 = vector.load %arg6[%c0_18, %c0_19, %c0_20, %c0_21] : memref<1x1x8x8xf32, #tpu.memory_space<vmem>>, vector<1x1x8x8xf32>
    %27 = vector.shape_cast %26 : vector<1x1x8x8xf32> to vector<8x8xf32>
    %28 = vector.shape_cast %25 : vector<8x8xf32> to vector<1x1x8x8xf32>
    tpu.vector_store %arg6[%c0_18, %c0_19, %c0_20, %c0_21], %28 {strides = array<i32>} : memref<1x1x8x8xf32, #tpu.memory_space<vmem>>, vector<1x1x8x8xf32>,
    return
  }
  func.func @transform_0(%arg0: i32, %arg1: i32) -> (i32, i32) {
    %c0_i32 = arith.constant 0 : i32
    %c0_i32_0 = arith.constant 0 : i32
    %c0_i32_1 = arith.constant 0 : i32
    return %c0_i32, %c0_i32_0 : i32, i32
  }
  func.func @transform_1(%arg0: i32, %arg1: i32) -> (i32, i32, i32, i32) {
    %c0_i32 = arith.constant 0 : i32
    %c0_i32_0 = arith.constant 0 : i32
    %c0_i32_1 = arith.constant 0 : i32
    return %arg0, %arg1, %c0_i32, %c0_i32_0 : i32, i32, i32, i32
  }
  func.func @transform_2(%arg0: i32, %arg1: i32) -> (i32, i32, i32, i32) {
    %c0_i32 = arith.constant 0 : i32
    %c0_i32_0 = arith.constant 0 : i32
    %c0_i32_1 = arith.constant 0 : i32
    return %arg0, %arg1, %c0_i32, %c0_i32_0 : i32, i32, i32, i32
  }
  func.func @transform_3(%arg0: i32, %arg1: i32) -> (i32, i32, i32, i32) {
    %c0_i32 = arith.constant 0 : i32
    %c0_i32_0 = arith.constant 0 : i32
    %c0_i32_1 = arith.constant 0 : i32
    return %arg0, %arg1, %c0_i32, %c0_i32_0 : i32, i32, i32, i32
  }
  func.func @transform_4(%arg0: i32, %arg1: i32) -> (i32, i32, i32, i32) {
    %c0_i32 = arith.constant 0 : i32
    %c0_i32_0 = arith.constant 0 : i32
    %c0_i32_1 = arith.constant 0 : i32
    return %arg0, %arg1, %c0_i32, %c0_i32_0 : i32, i32, i32, i32
  }
}

module attributes {stable_mosaic.version = 11 : i64} {
  func.func @_proj_mlp_kernel(%arg0: i32, %arg1: memref<16x32xf32, #tpu.memory_space<vmem>>, %arg2: memref<16x32xf32, #tpu.memory_space<vmem>>, %arg3: memref<32x32xbf16, #tpu.memory_space<vmem>>, %arg4: memref<1x32xf32, #tpu.memory_space<vmem>>, %arg5: memref<1x32xf32, #tpu.memory_space<vmem>>, %arg6: memref<1x32xf32, #tpu.memory_space<vmem>>, %arg7: memref<32x128xbf16, #tpu.memory_space<vmem>>, %arg8: memref<1x128xf32, #tpu.memory_space<vmem>>, %arg9: memref<128x32xbf16, #tpu.memory_space<vmem>>, %arg10: memref<1x32xf32, #tpu.memory_space<vmem>>, %arg11: memref<16x32xf32, #tpu.memory_space<vmem>>) attributes {dimension_semantics = [#tpu.dimension_semantics<parallel>], iteration_bounds = array<i64: 1>, scalar_prefetch = 0 : i64, scratch_operands = 0 : i64, tpu.core_type = #tpu.core_type<tc>, window_params = [{transform_indices = @transform_0, window_bounds = array<i64: 16, 32>}, {transform_indices = @transform_1, window_bounds = array<i64: 16, 32>}, {pipeline_mode = #tpu.pipeline_mode<synchronous>, transform_indices = @transform_2, window_bounds = array<i64: 32, 32>}, {pipeline_mode = #tpu.pipeline_mode<synchronous>, transform_indices = @transform_3, window_bounds = array<i64: 1, 32>}, {pipeline_mode = #tpu.pipeline_mode<synchronous>, transform_indices = @transform_4, window_bounds = array<i64: 1, 32>}, {pipeline_mode = #tpu.pipeline_mode<synchronous>, transform_indices = @transform_5, window_bounds = array<i64: 1, 32>}, {pipeline_mode = #tpu.pipeline_mode<synchronous>, transform_indices = @transform_6, window_bounds = array<i64: 32, 128>}, {pipeline_mode = #tpu.pipeline_mode<synchronous>, transform_indices = @transform_7, window_bounds = array<i64: 1, 128>}, {pipeline_mode = #tpu.pipeline_mode<synchronous>, transform_indices = @transform_8, window_bounds = array<i64: 128, 32>}, {pipeline_mode = #tpu.pipeline_mode<synchronous>, transform_indices = @transform_9, window_bounds = array<i64: 1, 32>}, {transform_indices = @transform_10, window_bounds = array<i64: 16, 32>}]} {
    %c0 = arith.constant 0 : index
    %c0_0 = arith.constant 0 : index
    %0 = vector.load %arg1[%c0, %c0_0] : memref<16x32xf32, #tpu.memory_space<vmem>>, vector<16x32xf32>
    %1 = arith.truncf %0 : vector<16x32xf32> to vector<16x32xbf16>
    %c0_1 = arith.constant 0 : index
    %c0_2 = arith.constant 0 : index
    %2 = vector.load %arg2[%c0_1, %c0_2] : memref<16x32xf32, #tpu.memory_space<vmem>>, vector<16x32xf32>
    %c0_3 = arith.constant 0 : index
    %c0_4 = arith.constant 0 : index
    %3 = vector.load %arg3[%c0_3, %c0_4] : memref<32x32xbf16, #tpu.memory_space<vmem>>, vector<32x32xbf16>
    %cst = arith.constant dense<0.000000e+00> : vector<16x32xf32>
    %4 = tpu.matmul %1, %3, %cst {dimension_numbers = #tpu.dot_dimension_numbers<[1], [0], [0], [1], [0, 0, 1, 1], [], []>} : vector<16x32xbf16>, vector<32x32xbf16>, vector<16x32xf32> -> vector<16x32xf32>
    %c0_5 = arith.constant 0 : index
    %c0_6 = arith.constant 0 : index
    %5 = vector.load %arg4[%c0_5, %c0_6] : memref<1x32xf32, #tpu.memory_space<vmem>>, vector<1x32xf32>
    %6 = vector.shape_cast %5 : vector<1x32xf32> to vector<32xf32>
    %7 = vector.shape_cast %6 : vector<32xf32> to vector<1x32xf32>
    %8 = vector.broadcast %7 : vector<1x32xf32> to vector<16x32xf32>
    %9 = arith.addf %4, %8 : vector<16x32xf32>
    %10 = arith.addf %2, %9 : vector<16x32xf32>
    %c0_7 = arith.constant 0 : index
    %c0_8 = arith.constant 0 : index
    %11 = vector.load %arg5[%c0_7, %c0_8] : memref<1x32xf32, #tpu.memory_space<vmem>>, vector<1x32xf32>
    %12 = vector.shape_cast %11 : vector<1x32xf32> to vector<32xf32>
    %c0_9 = arith.constant 0 : index
    %c0_10 = arith.constant 0 : index
    %13 = vector.load %arg6[%c0_9, %c0_10] : memref<1x32xf32, #tpu.memory_space<vmem>>, vector<1x32xf32>
    %14 = vector.shape_cast %13 : vector<1x32xf32> to vector<32xf32>
    %cst_11 = arith.constant dense<0.000000e+00> : vector<16xf32>
    %15 = vector.multi_reduction <add>, %10, %cst_11 [1] : vector<16x32xf32> to vector<16xf32>
    %16 = vector.shape_cast %15 : vector<16xf32> to vector<16x1xf32>
    %cst_12 = arith.constant 3.200000e+01 : f32
    %17 = vector.broadcast %cst_12 : f32 to vector<16x1xf32>
    %18 = arith.divf %16, %17 : vector<16x1xf32>
    %19 = vector.broadcast %18 : vector<16x1xf32> to vector<16x32xf32>
    %20 = arith.subf %10, %19 : vector<16x32xf32>
    %21 = arith.mulf %20, %20 : vector<16x32xf32>
    %cst_13 = arith.constant dense<0.000000e+00> : vector<16xf32>
    %22 = vector.multi_reduction <add>, %21, %cst_13 [1] : vector<16x32xf32> to vector<16xf32>
    %23 = vector.shape_cast %22 : vector<16xf32> to vector<16x1xf32>
    %cst_14 = arith.constant 3.200000e+01 : f32
    %24 = vector.broadcast %cst_14 : f32 to vector<16x1xf32>
    %25 = arith.divf %23, %24 : vector<16x1xf32>
    %26 = vector.broadcast %18 : vector<16x1xf32> to vector<16x32xf32>
    %27 = arith.subf %10, %26 : vector<16x32xf32>
    %cst_15 = arith.constant 9.99999974E-6 : f32
    %28 = vector.broadcast %cst_15 : f32 to vector<16x1xf32>
    %29 = arith.addf %25, %28 : vector<16x1xf32>
    %30 = math.rsqrt %29 : vector<16x1xf32>
    %31 = vector.broadcast %30 : vector<16x1xf32> to vector<16x32xf32>
    %32 = arith.mulf %27, %31 : vector<16x32xf32>
    %33 = vector.shape_cast %12 : vector<32xf32> to vector<1x32xf32>
    %34 = vector.broadcast %33 : vector<1x32xf32> to vector<16x32xf32>
    %35 = arith.mulf %32, %34 : vector<16x32xf32>
    %36 = vector.shape_cast %14 : vector<32xf32> to vector<1x32xf32>
    %37 = vector.broadcast %36 : vector<1x32xf32> to vector<16x32xf32>
    %38 = arith.addf %35, %37 : vector<16x32xf32>
    %39 = arith.truncf %38 : vector<16x32xf32> to vector<16x32xbf16>
    %c0_16 = arith.constant 0 : index
    %c0_17 = arith.constant 0 : index
    %40 = vector.load %arg7[%c0_16, %c0_17] : memref<32x128xbf16, #tpu.memory_space<vmem>>, vector<32x128xbf16>
    %cst_18 = arith.constant dense<0.000000e+00> : vector<16x128xf32>
    %41 = tpu.matmul %39, %40, %cst_18 {dimension_numbers = #tpu.dot_dimension_numbers<[1], [0], [0], [1], [0, 0, 1, 1], [], []>} : vector<16x32xbf16>, vector<32x128xbf16>, vector<16x128xf32> -> vector<16x128xf32>
    %c0_19 = arith.constant 0 : index
    %c0_20 = arith.constant 0 : index
    %42 = vector.load %arg8[%c0_19, %c0_20] : memref<1x128xf32, #tpu.memory_space<vmem>>, vector<1x128xf32>
    %43 = vector.shape_cast %42 : vector<1x128xf32> to vector<128xf32>
    %44 = vector.shape_cast %43 : vector<128xf32> to vector<1x128xf32>
    %45 = vector.broadcast %44 : vector<1x128xf32> to vector<16x128xf32>
    %46 = arith.addf %41, %45 : vector<16x128xf32>
    %cst_21 = arith.constant 5.000000e-01 : f32
    %47 = vector.broadcast %cst_21 : f32 to vector<16x128xf32>
    %48 = arith.mulf %47, %46 : vector<16x128xf32>
    %49 = arith.mulf %46, %46 : vector<16x128xf32>
    %50 = arith.mulf %46, %49 : vector<16x128xf32>
    %cst_22 = arith.constant 4.471500e-02 : f32
    %51 = vector.broadcast %cst_22 : f32 to vector<16x128xf32>
    %52 = arith.mulf %51, %50 : vector<16x128xf32>
    %53 = arith.addf %46, %52 : vector<16x128xf32>
    %cst_23 = arith.constant 0.797884583 : f32
    %54 = vector.broadcast %cst_23 : f32 to vector<16x128xf32>
    %55 = arith.mulf %54, %53 : vector<16x128xf32>
    %56 = math.tanh %55 : vector<16x128xf32>
    %cst_24 = arith.constant 1.000000e+00 : f32
    %57 = vector.broadcast %cst_24 : f32 to vector<16x128xf32>
    %58 = arith.addf %57, %56 : vector<16x128xf32>
    %59 = arith.mulf %48, %58 : vector<16x128xf32>
    %60 = arith.truncf %59 : vector<16x128xf32> to vector<16x128xbf16>
    %c0_25 = arith.constant 0 : index
    %c0_26 = arith.constant 0 : index
    %61 = vector.load %arg9[%c0_25, %c0_26] : memref<128x32xbf16, #tpu.memory_space<vmem>>, vector<128x32xbf16>
    %cst_27 = arith.constant dense<0.000000e+00> : vector<16x32xf32>
    %62 = tpu.matmul %60, %61, %cst_27 {dimension_numbers = #tpu.dot_dimension_numbers<[1], [0], [0], [1], [0, 0, 1, 1], [], []>} : vector<16x128xbf16>, vector<128x32xbf16>, vector<16x32xf32> -> vector<16x32xf32>
    %c0_28 = arith.constant 0 : index
    %c0_29 = arith.constant 0 : index
    %63 = vector.load %arg10[%c0_28, %c0_29] : memref<1x32xf32, #tpu.memory_space<vmem>>, vector<1x32xf32>
    %64 = vector.shape_cast %63 : vector<1x32xf32> to vector<32xf32>
    %65 = vector.shape_cast %64 : vector<32xf32> to vector<1x32xf32>
    %66 = vector.broadcast %65 : vector<1x32xf32> to vector<16x32xf32>
    %67 = arith.addf %62, %66 : vector<16x32xf32>
    %68 = arith.addf %10, %67 : vector<16x32xf32>
    %c0_30 = arith.constant 0 : index
    %c0_31 = arith.constant 0 : index
    %69 = vector.load %arg11[%c0_30, %c0_31] : memref<16x32xf32, #tpu.memory_space<vmem>>, vector<16x32xf32>
    tpu.vector_store %arg11[%c0_30, %c0_31], %68 {strides = array<i32>} : memref<16x32xf32, #tpu.memory_space<vmem>>, vector<16x32xf32>,
    return
  }
  func.func @transform_0(%arg0: i32) -> (i32, i32) {
    %c0_i32 = arith.constant 0 : i32
    %c0_i32_0 = arith.constant 0 : i32
    return %arg0, %c0_i32 : i32, i32
  }
  func.func @transform_1(%arg0: i32) -> (i32, i32) {
    %c0_i32 = arith.constant 0 : i32
    %c0_i32_0 = arith.constant 0 : i32
    return %arg0, %c0_i32 : i32, i32
  }
  func.func @transform_2(%arg0: i32) -> (i32, i32) {
    %c0_i32 = arith.constant 0 : i32
    %c0_i32_0 = arith.constant 0 : i32
    %c0_i32_1 = arith.constant 0 : i32
    return %c0_i32, %c0_i32_0 : i32, i32
  }
  func.func @transform_3(%arg0: i32) -> (i32, i32) {
    %c0_i32 = arith.constant 0 : i32
    %c0_i32_0 = arith.constant 0 : i32
    %c0_i32_1 = arith.constant 0 : i32
    return %c0_i32, %c0_i32_0 : i32, i32
  }
  func.func @transform_4(%arg0: i32) -> (i32, i32) {
    %c0_i32 = arith.constant 0 : i32
    %c0_i32_0 = arith.constant 0 : i32
    %c0_i32_1 = arith.constant 0 : i32
    return %c0_i32, %c0_i32_0 : i32, i32
  }
  func.func @transform_5(%arg0: i32) -> (i32, i32) {
    %c0_i32 = arith.constant 0 : i32
    %c0_i32_0 = arith.constant 0 : i32
    %c0_i32_1 = arith.constant 0 : i32
    return %c0_i32, %c0_i32_0 : i32, i32
  }
  func.func @transform_6(%arg0: i32) -> (i32, i32) {
    %c0_i32 = arith.constant 0 : i32
    %c0_i32_0 = arith.constant 0 : i32
    %c0_i32_1 = arith.constant 0 : i32
    return %c0_i32, %c0_i32_0 : i32, i32
  }
  func.func @transform_7(%arg0: i32) -> (i32, i32) {
    %c0_i32 = arith.constant 0 : i32
    %c0_i32_0 = arith.constant 0 : i32
    %c0_i32_1 = arith.constant 0 : i32
    return %c0_i32, %c0_i32_0 : i32, i32
  }
  func.func @transform_8(%arg0: i32) -> (i32, i32) {
    %c0_i32 = arith.constant 0 : i32
    %c0_i32_0 = arith.constant 0 : i32
    %c0_i32_1 = arith.constant 0 : i32
    return %c0_i32, %c0_i32_0 : i32, i32
  }
  func.func @transform_9(%arg0: i32) -> (i32, i32) {
    %c0_i32 = arith.constant 0 : i32
    %c0_i32_0 = arith.constant 0 : i32
    %c0_i32_1 = arith.constant 0 : i32
    return %c0_i32, %c0_i32_0 : i32, i32
  }
  func.func @transform_10(%arg0: i32) -> (i32, i32) {
    %c0_i32 = arith.constant 0 : i32
    %c0_i32_0 = arith.constant 0 : i32
    return %arg0, %c0_i32 : i32, i32
  }
}

</mosaic_0001>

<llo_original>
// kernel: block_forward.4
$region0: #{block_forward.4}
  #allocation0 [shape = 'u32[]', space=smem, size = 0x4, offset = 0x4, fixed_abs, tag = 'smem constant byte address 0x4 - core index']
  #allocation1 [shape = 'u32[144,128]{1,0:T(1,128)}', space=vmem, size = 0x12000, scoped, tag = 'internal scratch']
  %s0 = inlined_call_operand.vmem [shape: f32[8,8], index: 0, kind: input, shape index: {}]
  %s1 = inlined_call_operand.vmem [shape: f32[2,4,8,8], index: 1, kind: input, shape index: {}]
  %s2 = inlined_call_operand.vmem [shape: f32[2,4,8,8], index: 2, kind: input, shape index: {}]
  %s3 = inlined_call_operand.vmem [shape: f32[2,4,8,8], index: 3, kind: input, shape index: {}]
  %s4 = inlined_call_operand.vmem [shape: f32[2,4,8,8], index: 4, kind: output, shape index: {}]
  %s5 = sld [smem:[#allocation0]]
  $region49: #{block_forward.4} parent=0
    _
  %s7 = ssub.s32 1, %s5
  %s8 = scalar_select 0, %s7, %s5
  loop: start=0, step=1, limit=10
  $region2: #{block_forward.4} parent=0 // loop_pre_header
    _
  $region3: #{block_forward.4} parent=0 // loop_header
    %s10 = sphi 0, %s14
    %p11 = scmp.ge.s32.totalorder %s10, 10
    %s17 = sphi 0, %s29
    %s18 = sphi 0, %s25
    %s19 = sphi 0, %s17
    %s20 = sphi 0, %s18
    %s21 = sphi 0, %s19
    %s22 = sphi 0, %s20
    %s30 = sphi 0, %s30
    %s32 = sphi 0, %s30
    %s33 = sphi 0, %s32
    %s47 = sphi 0, %s33
    %s55 = sphi 0, %s57
    %s58 = sphi 0, %s55
    %s59 = sphi 0, %s58
    %s75 = sphi 0, %s59
    %s83 = sphi 0, %s85
    %s86 = sphi 0, %s83
    %s87 = sphi 0, %s86
    %s103 = sphi 0, %s87
    %s111 = sphi 0, %s113
    %s114 = sphi 0, %s111
    %s115 = sphi 0, %s114
    %s131 = sphi 0, %s115
    %s139 = sphi 0, %s141
    %s142 = sphi 0, %s139
    %s143 = sphi 0, %s142
    %s159 = sphi 0, %s143
  $region4: #{block_forward.4} parent=0 // loop_header_branch
    %13 = sbr.rel (%p11) target = $region8
  $region5: #{block_forward.4} parent=0 // loop_body
    %s15 = ssub.s32 %s10, 1
    %s16 = ssub.s32 %s10, 2
    %s23 = sadd.s32 1, %s18
    %p24 = scmp.ge.s32.totalorder %s23, 4
    %s25 = scalar_select %p24, 0, %s23
    %s26 = sadd.s32 1, %s17
    %s27 = scalar_select %p24, %s26, %s17
    %p28 = scmp.ge.s32.totalorder %s27, 2
    %s29 = scalar_select %p28, 0, %s27
    %s31 = sadd.s32 %s30, 1
    %p34 = scmp.eq.s32.totalorder %s10, 7
    %p35 = scmp.ne.s32.totalorder %s30, %s32
    %p36 = scmp.eq.s32.totalorder %s10, 0
    %p37 = por %p35, %p36
    %p38 = scmp.ne.s32.totalorder %s30, %s32
    %p39 = scmp.eq.s32.totalorder %s15, 7
    %p40 = por %p38, %p39
    %p41 = scmp.ne.s32.totalorder %s32, %s33
    %p42 = scmp.eq.s32.totalorder %s15, 0
    %p43 = por %p41, %p42
    %p44 = scmp.ne.s32.totalorder %s32, %s33
    %p45 = scmp.eq.s32.totalorder %s16, 7
    %p46 = por %p44, %p45
    %p48 = scmp.ne.s32.totalorder %s33, %s47
    %p49 = scmp.eq.s32.totalorder %s16, 0
    %p50 = por %p48, %p49
    %s51 = ssub.s32 %s17, %s29
    %s52 = ssub.s32 %s18, %s25
    %s53 = sor.u32 %s51, %s52
    %p54 = scmp.eq.s32.totalorder %s53, 0
    %s56 = sadd.s32 %s55, 1
    %s57 = scalar_select %p54, %s55, %s56
    %p60 = pneg %p54
    %p61 = scmp.eq.s32.totalorder %s10, 7
    %p62 = por %p60, %p61
    %p63 = scmp.ne.s32.totalorder %s55, %s58
    %p64 = scmp.eq.s32.totalorder %s10, 0
    %p65 = por %p63, %p64
    %p66 = scmp.ne.s32.totalorder %s55, %s58
    %p67 = scmp.eq.s32.totalorder %s15, 7
    %p68 = por %p66, %p67
    %p69 = scmp.ne.s32.totalorder %s58, %s59
    %p70 = scmp.eq.s32.totalorder %s15, 0
    %p71 = por %p69, %p70
    %p72 = scmp.ne.s32.totalorder %s58, %s59
    %p73 = scmp.eq.s32.totalorder %s16, 7
    %p74 = por %p72, %p73
    %p76 = scmp.ne.s32.totalorder %s59, %s75
    %p77 = scmp.eq.s32.totalorder %s16, 0
    %p78 = por %p76, %p77
    %s79 = ssub.s32 %s17, %s29
    %s80 = ssub.s32 %s18, %s25
    %s81 = sor.u32 %s79, %s80
    %p82 = scmp.eq.s32.totalorder %s81, 0
    %s84 = sadd.s32 %s83, 1
    %s85 = scalar_select %p82, %s83, %s84
    %p88 = pneg %p82
    %p89 = scmp.eq.s32.totalorder %s10, 7
    %p90 = por %p88, %p89
    %p91 = scmp.ne.s32.totalorder %s83, %s86
    %p92 = scmp.eq.s32.totalorder %s10, 0
    %p93 = por %p91, %p92
    %p94 = scmp.ne.s32.totalorder %s83, %s86
    %p95 = scmp.eq.s32.totalorder %s15, 7
    %p96 = por %p94, %p95
    %p97 = scmp.ne.s32.totalorder %s86, %s87
    %p98 = scmp.eq.s32.totalorder %s15, 0
    %p99 = por %p97, %p98
    %p100 = scmp.ne.s32.totalorder %s86, %s87
    %p101 = scmp.eq.s32.totalorder %s16, 7
    %p102 = por %p100, %p101
    %p104 = scmp.ne.s32.totalorder %s87, %s103
    %p105 = scmp.eq.s32.totalorder %s16, 0
    %p106 = por %p104, %p105
    %s107 = ssub.s32 %s17, %s29
    %s108 = ssub.s32 %s18, %s25
    %s109 = sor.u32 %s107, %s108
    %p110 = scmp.eq.s32.totalorder %s109, 0
    %s112 = sadd.s32 %s111, 1
    %s113 = scalar_select %p110, %s111, %s112
    %p116 = pneg %p110
    %p117 = scmp.eq.s32.totalorder %s10, 7
    %p118 = por %p116, %p117
    %p119 = scmp.ne.s32.totalorder %s111, %s114
    %p120 = scmp.eq.s32.totalorder %s10, 0
    %p121 = por %p119, %p120
    %p122 = scmp.ne.s32.totalorder %s111, %s114
    %p123 = scmp.eq.s32.totalorder %s15, 7
    %p124 = por %p122, %p123
    %p125 = scmp.ne.s32.totalorder %s114, %s115
    %p126 = scmp.eq.s32.totalorder %s15, 0
    %p127 = por %p125, %p126
    %p128 = scmp.ne.s32.totalorder %s114, %s115
    %p129 = scmp.eq.s32.totalorder %s16, 7
    %p130 = por %p128, %p129
    %p132 = scmp.ne.s32.totalorder %s115, %s131
    %p133 = scmp.eq.s32.totalorder %s16, 0
    %p134 = por %p132, %p133
    %s135 = ssub.s32 %s17, %s29
    %s136 = ssub.s32 %s18, %s25
    %s137 = sor.u32 %s135, %s136
    %p138 = scmp.eq.s32.totalorder %s137, 0
    %s140 = sadd.s32 %s139, 1
    %s141 = scalar_select %p138, %s139, %s140
    %p144 = pneg %p138
    %p145 = scmp.eq.s32.totalorder %s10, 7
    %p146 = por %p144, %p145
    %p147 = scmp.ne.s32.totalorder %s139, %s142
    %p148 = scmp.eq.s32.totalorder %s10, 0
    %p149 = por %p147, %p148
    %p150 = scmp.ne.s32.totalorder %s139, %s142
    %p151 = scmp.eq.s32.totalorder %s15, 7
    %p152 = por %p150, %p151
    %p153 = scmp.ne.s32.totalorder %s142, %s143
    %p154 = scmp.eq.s32.totalorder %s15, 0
    %p155 = por %p153, %p154
    %p156 = scmp.ne.s32.totalorder %s142, %s143
    %p157 = scmp.eq.s32.totalorder %s16, 7
    %p158 = por %p156, %p157
    %p160 = scmp.ne.s32.totalorder %s143, %s159
    %p161 = scmp.eq.s32.totalorder %s16, 0
    %p162 = por %p160, %p161
    %p163 = scmp.le.s32.totalorder 1, %s10
    %p164 = scmp.lt.s32.totalorder %s10, 9
    %p165 = pnand %p163, %p164
    %p166 = pneg %p165
    // Predicated region
    $region9: #{block_forward.4} parent=5 // pred_check
      _
    $region10: #{block_forward.4} parent=5 // pred_check_branch
      %168 = sbr.rel (%p165) target = $region12
    $region11: #{block_forward.4} parent=5 // pred_region
      %s169 = ssub.s32 %s10, 1
      // Predicated region
      $region13: #{block_forward.4} parent=11 // pred_check
        %p170 = pneg %p43
      $region14: #{block_forward.4} parent=11 // pred_check_branch
        %172 = sbr.rel (%p170) target = $region16
      $region15: #{block_forward.4} parent=11 // pred_region
        _
      $region16: #{block_forward.4} parent=11 // pred_fallthru
        _
    $region12: #{block_forward.4} parent=5 // pred_fallthru
      _
    %p173 = scmp.lt.s32.totalorder %s10, 8
    // Predicated region
    $region17: #{block_forward.4} parent=5 // pred_check
      %p174 = pneg %p173
    $region18: #{block_forward.4} parent=5 // pred_check_branch
      %176 = sbr.rel (%p174) target = $region20
    $region19: #{block_forward.4} parent=5 // pred_region
      // Predicated region
      $region21: #{block_forward.4} parent=19 // pred_check
        %p177 = pneg %p65
      $region22: #{block_forward.4} parent=19 // pred_check_branch
        %179 = sbr.rel (%p177) target = $region24
      $region23: #{block_forward.4} parent=19 // pred_region
        %p180 = scmp.lt.s32.totalorder %s17, 1
        %s181 = scalar_select %p180, %s17, 1
        %p182 = scmp.lt.s32.totalorder %s18, 3
        %s183 = scalar_select %p182, %s18, 3
        %s184 = smul.addr %s181, 4
        %s185 = sadd.s32 %s183, %s184
        %s186 = smul.addr %s185, 8
        %s187 = scalar_lea.vmem %s1, %s186
      $region24: #{block_forward.4} parent=19 // pred_fallthru
        _
      // Predicated region
      $region25: #{block_forward.4} parent=19 // pred_check
        %p188 = pneg %p93
      $region26: #{block_forward.4} parent=19 // pred_check_branch
        %190 = sbr.rel (%p188) target = $region28
      $region27: #{block_forward.4} parent=19 // pred_region
        %p191 = scmp.lt.s32.totalorder %s17, 1
        %s192 = scalar_select %p191, %s17, 1
        %p193 = scmp.lt.s32.totalorder %s18, 3
        %s194 = scalar_select %p193, %s18, 3
        %s195 = smul.addr %s192, 4
        %s196 = sadd.s32 %s194, %s195
        %s197 = smul.addr %s196, 8
        %s198 = scalar_lea.vmem %s2, %s197
      $region28: #{block_forward.4} parent=19 // pred_fallthru
        _
      // Predicated region
      $region29: #{block_forward.4} parent=19 // pred_check
        %p199 = pneg %p121
      $region30: #{block_forward.4} parent=19 // pred_check_branch
        %201 = sbr.rel (%p199) target = $region32
      $region31: #{block_forward.4} parent=19 // pred_region
        %p202 = scmp.lt.s32.totalorder %s17, 1
        %s203 = scalar_select %p202, %s17, 1
        %p204 = scmp.lt.s32.totalorder %s18, 3
        %s205 = scalar_select %p204, %s18, 3
        %s206 = smul.addr %s203, 4
        %s207 = sadd.s32 %s205, %s206
        %s208 = smul.addr %s207, 8
        %s209 = scalar_lea.vmem %s3, %s208
      $region32: #{block_forward.4} parent=19 // pred_fallthru
        _
    $region20: #{block_forward.4} parent=5 // pred_fallthru
      _
    %p210 = scmp.le.s32.totalorder 1, %s10
    %p211 = scmp.lt.s32.totalorder %s10, 9
    %p212 = pnand %p210, %p211
    %p213 = pneg %p212
    // Predicated region
    $region33: #{block_forward.4} parent=5 // pred_check
      _
    $region34: #{block_forward.4} parent=5 // pred_check_branch
      %215 = sbr.rel (%p212) target = $region36
    $region35: #{block_forward.4} parent=5 // pred_region
      %s216 = ssub.s32 %s10, 1
      %p217 = pneg %p43
      %p218 = pneg %p40
      %p219 = scmp.lt.s32.totalorder %s19, 1
      %s220 = scalar_select %p219, %s19, 1
      %p221 = scmp.lt.s32.totalorder %s20, 3
      %s222 = scalar_select %p221, %s20, 3
      %s223 = smul.addr %s220, 4
      %s224 = sadd.s32 %s222, %s223
      %s225 = smul.addr %s224, 8
      %s226 = scalar_lea.vmem %s1, %s225
      %p227 = pneg %p71
      %p228 = pneg %p68
      %p229 = scmp.lt.s32.totalorder %s19, 1
      %s230 = scalar_select %p229, %s19, 1
      %p231 = scmp.lt.s32.totalorder %s20, 3
      %s232 = scalar_select %p231, %s20, 3
      %s233 = smul.addr %s230, 4
      %s234 = sadd.s32 %s232, %s233
      %s235 = smul.addr %s234, 8
      %s236 = scalar_lea.vmem %s2, %s235
      %p237 = pneg %p99
      %p238 = pneg %p96
      %p239 = scmp.lt.s32.totalorder %s19, 1
      %s240 = scalar_select %p239, %s19, 1
      %p241 = scmp.lt.s32.totalorder %s20, 3
      %s242 = scalar_select %p241, %s20, 3
      %s243 = smul.addr %s240, 4
      %s244 = sadd.s32 %s242, %s243
      %s245 = smul.addr %s244, 8
      %s246 = scalar_lea.vmem %s3, %s245
      %p247 = pneg %p127
      %p248 = pneg %p124
      %p249 = pneg %p155
      %p250 = pneg %p152
      %p251 = scmp.lt.s32.totalorder %s19, 1
      %s252 = scalar_select %p251, %s19, 1
      %p253 = scmp.lt.s32.totalorder %s20, 3
      %s254 = scalar_select %p253, %s20, 3
      %s255 = smul.addr %s252, 4
      %s256 = sadd.s32 %s254, %s255
      %s257 = smul.addr %s256, 8
      %s258 = scalar_lea.vmem %s4, %s257
      %p259 = scmp.lt.s32.totalorder %s19, 1
      %s260 = scalar_select %p259, %s19, 1
      %p261 = scmp.lt.s32.totalorder %s20, 3
      %s262 = scalar_select %p261, %s20, 3
      %s263 = smul.addr %s260, 4
      %s264 = sadd.s32 %s262, %s263
      %s265 = smul.addr %s264, 8
      %s266 = scalar_lea.vmem %s1, %s265
      %p267 = scmp.lt.s32.totalorder %s19, 1
      %s268 = scalar_select %p267, %s19, 1
      %p269 = scmp.lt.s32.totalorder %s20, 3
      %s270 = scalar_select %p269, %s20, 3
      %s271 = smul.addr %s268, 4
      %s272 = sadd.s32 %s270, %s271
      %s273 = smul.addr %s272, 8
      %s274 = scalar_lea.vmem %s2, %s273
      %p275 = scmp.lt.s32.totalorder %s19, 1
      %s276 = scalar_select %p275, %s19, 1
      %p277 = scmp.lt.s32.totalorder %s20, 3
      %s278 = scalar_select %p277, %s20, 3
      %s279 = smul.addr %s276, 4
      %s280 = sadd.s32 %s278, %s279
      %s281 = smul.addr %s280, 8
      %s282 = scalar_lea.vmem %s3, %s281
      %p283 = scmp.lt.s32.totalorder %s19, 1
      %s284 = scalar_select %p283, %s19, 1
      %p285 = scmp.lt.s32.totalorder %s20, 3
      %s286 = scalar_select %p285, %s20, 3
      %s287 = smul.addr %s284, 4
      %s288 = sadd.s32 %s286, %s287
      %s289 = smul.addr %s288, 8
      %s290 = scalar_lea.vmem %s4, %s289
      %v292 = vld [vmem:[%s266] sm:$0xff]
      %v293 = vpack.c.bf16 %v292, %v292
      %v294 = vld [vmem:[%s274] sm:$0xff]
      %v295 = vpack.c.bf16 %v294, %v294
      %v296 = vld [vmem:[%s282] sm:$0xff]
      %v297 = vpack.c.bf16 %v296, %v296
      %vm298 = vcmask 64512
      %v300 = vsel %vm298, %v293, 0
      %v303 = vsel %vm298, %v295, 0
      %305 = vmatprep.subr.bf16.mxu0 0
      %306 = vmatpush1.bf16.xpose.msra.mxu0 0
      %307 = vmatprep.subr.bf16.mxu0 0
      %308 = vmatpush1.bf16.xpose.msra.mxu0 0
      %309 = vmatprep.subr.bf16.mxu0 0
      %310 = vmatpush1.bf16.xpose.msra.mxu0 0
      %311 = vmatprep.subr.bf16.mxu0 0
      %312 = vmatpush1.bf16.xpose.msra.mxu0 0
      %313 = vmatprep.subr.bf16.mxu0 0
      %314 = vmatpush1.bf16.xpose.msra.mxu0 0
      %315 = vmatprep.subr.bf16.mxu0 0
      %316 = vmatpush1.bf16.xpose.msra.mxu0 0
      %317 = vmatprep.subr.bf16.mxu0 0
      %318 = vmatpush1.bf16.xpose.msra.mxu0 0
      %319 = vmatprep.subr.bf16.mxu0 0
      %320 = vmatpush1.bf16.xpose.msra.mxu0 %v303
      %321 = vmatprep.subr.bf16.mxu0 0
      %322 = vmatpush2.bf16.xpose.msra.mxu0 0
      %323 = vmatprep.subr.bf16.mxu0 0
      %324 = vmatpush2.bf16.xpose.msra.mxu0 0
      %325 = vmatprep.subr.bf16.mxu0 0
      %326 = vmatpush2.bf16.xpose.msra.mxu0 0
      %327 = vmatprep.subr.bf16.mxu0 0
      %328 = vmatpush2.bf16.xpose.msra.mxu0 0
      %329 = vmatprep.subr.bf16.mxu0 0
      %330 = vmatpush2.bf16.xpose.msra.mxu0 0
      %331 = vmatprep.subr.bf16.mxu0 0
      %332 = vmatpush2.bf16.xpose.msra.mxu0 0
      %333 = vmatprep.subr.bf16.mxu0 0
      %334 = vmatpush2.bf16.xpose.msra.mxu0 0
      %335 = vmatprep.subr.bf16.mxu0 0
      %336 = vmatpush2.bf16.xpose.msra.mxu0 0
      %337 = vmatprep.mubr.bf16.mxu0 0
      %338 = vmatmul.mubr.bf16.gmra.mxu0 %v300
      %v339 = vpop.f32.mrf.mxu0
      %v340 = vadd.f32 0.0, %v339
      %v341 = vpop.f32.mrf.mxu0
      %v342 = vpop.f32.mrf.mxu0
      %v343 = vpop.f32.mrf.mxu0
      %344 = vdwg.mxu0
      %v345 = vld [vmem:[%s0] sm:$0xff]
      %vm346 = vcmp.gt.f32.partialorder %v345, 0.5
      %v347 = vsel %vm346, %v340, -10000.0
      %v348 = vsel %vm298, %v347, -inf
      %349 = vmax.xlane.f32.xlu0 %v348
      %v350 = vpop.xlane.xlu0 %349
      %v351 = vsub.f32 %v347, %v350
      %v352 = vmul.f32 %v351, 1.442695
      %v353 = vpow.pop %v352
      %v354 = vsel %vm298, %v353, 0.0
      %355 = vadd.xlane.f32.xlu0 %v354
      %v356 = vpop.xlane.xlu0 %355
      %v357 = vrcp.pop %v356
      %v358 = vmul.f32 %v353, %v357
      %v359 = vpack.c.bf16 %v358, %v358
      %v361 = vsel %vm298, %v359, 0
      %vm363 = vcmask 1043456
      %v365 = vsel %vm363, %v297, 0
      %367 = vmatprep.subr.bf16.mxu0 0
      %368 = vmatpush1.bf16.msra.mxu0 0
      %369 = vmatprep.subr.bf16.mxu0 0
      %370 = vmatpush1.bf16.msra.mxu0 0
      %371 = vmatprep.subr.bf16.mxu0 0
      %372 = vmatpush1.bf16.msra.mxu0 0
      %373 = vmatprep.subr.bf16.mxu0 0
      %374 = vmatpush1.bf16.msra.mxu0 0
      %375 = vmatprep.subr.bf16.mxu0 0
      %376 = vmatpush1.bf16.msra.mxu0 0
      %377 = vmatprep.subr.bf16.mxu0 0
      %378 = vmatpush1.bf16.msra.mxu0 0
      %379 = vmatprep.subr.bf16.mxu0 0
      %380 = vmatpush1.bf16.msra.mxu0 0
      %381 = vmatprep.subr.bf16.mxu0 0
      %382 = vmatpush1.bf16.msra.mxu0 %v365
      %383 = vmatprep.subr.bf16.mxu0 0
      %384 = vmatpush2.bf16.msra.mxu0 0
      %385 = vmatprep.subr.bf16.mxu0 0
      %386 = vmatpush2.bf16.msra.mxu0 0
      %387 = vmatprep.subr.bf16.mxu0 0
      %388 = vmatpush2.bf16.msra.mxu0 0
      %389 = vmatprep.subr.bf16.mxu0 0
      %390 = vmatpush2.bf16.msra.mxu0 0
      %391 = vmatprep.subr.bf16.mxu0 0
      %392 = vmatpush2.bf16.msra.mxu0 0
      %393 = vmatprep.subr.bf16.mxu0 0
      %394 = vmatpush2.bf16.msra.mxu0 0
      %395 = vmatprep.subr.bf16.mxu0 0
      %396 = vmatpush2.bf16.msra.mxu0 0
      %397 = vmatprep.subr.bf16.mxu0 0
      %398 = vmatpush2.bf16.msra.mxu0 0
      %399 = vmatprep.mubr.bf16.mxu0 0
      %400 = vmatmul.mubr.bf16.gmra.mxu0 %v361
      %v401 = vpop.f32.mrf.mxu0
      %v402 = vadd.f32 0.0, %v401
      %v403 = vpop.f32.mrf.mxu0
      %v404 = vpop.f32.mrf.mxu0
      %v405 = vpop.f32.mrf.mxu0
      %406 = vdwg.mxu0
      %407 = vst.msk [vmem:[%s290] sm:$0xff] %vm298, %v402
      %p408 = scmp.lt.s32.totalorder %s19, 1
      %s409 = scalar_select %p408, %s19, 1
      %p410 = scmp.lt.s32.totalorder %s20, 3
      %s411 = scalar_select %p410, %s20, 3
      %s412 = smul.addr %s409, 4
      %s413 = sadd.s32 %s411, %s412
      %s414 = smul.addr %s413, 8
      %s415 = scalar_lea.vmem %s4, %s414
      // Predicated region
      $region37: #{block_forward.4} parent=35 // pred_check
        %p416 = pneg %p152
      $region38: #{block_forward.4} parent=35 // pred_check_branch
        %418 = sbr.rel (%p416) target = $region40
      $region39: #{block_forward.4} parent=35 // pred_region
        _
      $region40: #{block_forward.4} parent=35 // pred_fallthru
        _
    $region36: #{block_forward.4} parent=5 // pred_fallthru
      _
    %p419 = scmp.le.s32.totalorder 2, %s10
    // Predicated region
    $region41: #{block_forward.4} parent=5 // pred_check
      %p420 = pneg %p419
    $region42: #{block_forward.4} parent=5 // pred_check_branch
      %422 = sbr.rel (%p420) target = $region44
    $region43: #{block_forward.4} parent=5 // pred_region
      %s423 = ssub.s32 %s10, 2
      // Predicated region
      $region45: #{block_forward.4} parent=43 // pred_check
        %p424 = pneg %p158
      $region46: #{block_forward.4} parent=43 // pred_check_branch
        %426 = sbr.rel (%p424) target = $region48
      $region47: #{block_forward.4} parent=43 // pred_region
        %p427 = scmp.lt.s32.totalorder %s21, 1
        %s428 = scalar_select %p427, %s21, 1
        %p429 = scmp.lt.s32.totalorder %s22, 3
        %s430 = scalar_select %p429, %s22, 3
        %s431 = smul.addr %s428, 4
        %s432 = sadd.s32 %s430, %s431
        %s433 = smul.addr %s432, 8
        %s434 = scalar_lea.vmem %s4, %s433
      $region48: #{block_forward.4} parent=43 // pred_fallthru
        _
    $region44: #{block_forward.4} parent=5 // pred_fallthru
      _
  $region6: #{block_forward.4} parent=0 // loop_footer
    %s14 = sadd.s32 1, %s10
  $region7: #{block_forward.4} parent=0 // loop_footer_branch
    %9 = sbr.rel target = $region3
  $region8: #{block_forward.4} parent=0 // loop_exit
    _

// kernel: block_forward.3
$region0: #{block_forward.3}
  #allocation0 [shape = 'u32[]', space=smem, size = 0x4, offset = 0x4, fixed_abs, tag = 'smem constant byte address 0x4 - core index']
  #allocation1 [shape = 'u32[144,128]{1,0:T(1,128)}', space=vmem, size = 0x12000, scoped, tag = 'internal scratch']
  %s0 = inlined_call_operand.vmem [shape: f32[16,32], index: 0, kind: input, shape index: {}]
  %s1 = inlined_call_operand.vmem [shape: f32[1,32], index: 1, kind: input, shape index: {}]
  %s2 = inlined_call_operand.vmem [shape: f32[1,32], index: 2, kind: input, shape index: {}]
  %s3 = inlined_call_operand.hbm [shape: bf16[32,96], index: 3, kind: input, shape index: {}]
  %s4 = inlined_call_operand.vmem [shape: f32[1,96], index: 4, kind: input, shape index: {}]
  %s5 = inlined_call_operand.vmem [shape: f32[16,96], index: 5, kind: output, shape index: {}]
  %s6 = sld [smem:[#allocation0]]
  $region34: #{block_forward.3} parent=0
    _
  %s8 = ssub.s32 1, %s6
  %s9 = scalar_select 0, %s8, %s6
  $region1: #{block_forward.3} parent=0
    #allocation2 [shape = 'u8[8192]{0}', space=vmem, size = 0x2000, scoped, tag = 'input window, operand 3, single buffered']
    #allocation3 [shape = 's32[1]{0}', space=sflag, size = 0x4, scoped, tag = 'scoped memory for block_forward.3']
    %10 = vsyncpa [#allocation3], 0
    // Predicated region
    $region2: #{block_forward.3} parent=1 // pred_check
      _
    $region3: #{block_forward.3} parent=1 // pred_check_branch
      %12 = sbr.rel (0) target = $region5
    $region4: #{block_forward.3} parent=1 // pred_region
      _
    $region5: #{block_forward.3} parent=1 // pred_fallthru
      _
    // Predicated region
    $region6: #{block_forward.3} parent=1 // pred_check
      _
    $region7: #{block_forward.3} parent=1 // pred_check_branch
      %14 = sbr.rel (0) target = $region9
    $region8: #{block_forward.3} parent=1 // pred_region
      _
    $region9: #{block_forward.3} parent=1 // pred_fallthru
      _
    // Predicated region
    $region10: #{block_forward.3} parent=1 // pred_check
      _
    $region11: #{block_forward.3} parent=1 // pred_check_branch
      %16 = sbr.rel (0) target = $region13
    $region12: #{block_forward.3} parent=1 // pred_region
      _
    $region13: #{block_forward.3} parent=1 // pred_fallthru
      _
    // Predicated region
    $region14: #{block_forward.3} parent=1 // pred_check
      _
    $region15: #{block_forward.3} parent=1 // pred_check_branch
      %18 = sbr.rel (0) target = $region17
    $region16: #{block_forward.3} parent=1 // pred_region
      %s20 = ssub.s32 256, 256
      %21 = vsyncadd [#allocation3], %s20
      %s22 = sshll.u32 [#allocation2], 4
      %s23 = int_to_ptr.vmem [resolvable:$true] %s22
      %28 = dma.hbm_to_vmem [thread:$0]  %s3, 256, %s23, [#allocation3], 64, 64, 4
    $region17: #{block_forward.3} parent=1 // pred_fallthru
      _
    // Predicated region
    $region18: #{block_forward.3} parent=1 // pred_check
      _
    $region19: #{block_forward.3} parent=1 // pred_check_branch
      %30 = sbr.rel (0) target = $region21
    $region20: #{block_forward.3} parent=1 // pred_region
      _
    $region21: #{block_forward.3} parent=1 // pred_fallthru
      _
    // Predicated region
    $region22: #{block_forward.3} parent=1 // pred_check
      _
    $region23: #{block_forward.3} parent=1 // pred_check_branch
      %32 = sbr.rel (0) target = $region25
    $region24: #{block_forward.3} parent=1 // pred_region
      %33 = dma.done [#allocation3], 256
    $region25: #{block_forward.3} parent=1 // pred_fallthru
      _
    %v35 = vld [vmem:[%s0] sm:$0xff]
    %v36 = vld [vmem:[%s0 + $0x8] sm:$0xff]
    %v37 = vld [vmem:[%s1] sm:$0x1]
    %v38 = vld [vmem:[%s2] sm:$0x1]
    %vm39 = vcmask 261120
    %v40 = vsel %vm39, %v35, 0.0
    %41 = vadd.xlane.f32.xlu0 %v40
    %v42 = vpop.xlane.xlu0 %41
    %v43 = vsel %vm39, %v36, 0.0
    %44 = vadd.xlane.f32.xlu0 %v43
    %v45 = vpop.xlane.xlu0 %44
    %v46 = vrcp.pop 32.0
    %v47 = vmul.f32 %v42, %v46
    %v48 = vmul.f32 %v45, %v46
    %v49 = vsub.f32 %v35, %v47
    %v50 = vsub.f32 %v36, %v48
    %v51 = vmul.f32 %v49, %v49
    %v52 = vmul.f32 %v50, %v50
    %v53 = vsel %vm39, %v51, 0.0
    %54 = vadd.xlane.f32.xlu0 %v53
    %v55 = vpop.xlane.xlu0 %54
    %v56 = vsel %vm39, %v52, 0.0
    %57 = vadd.xlane.f32.xlu0 %v56
    %v58 = vpop.xlane.xlu0 %57
    %v59 = vmul.f32 %v55, %v46
    %v60 = vmul.f32 %v58, %v46
    %v61 = vadd.f32 %v59, 1e-05
    %v62 = vadd.f32 %v60, 1e-05
    %v63 = vrsqrt.pop %v61
    %v64 = vrsqrt.pop %v62
    %v65 = vmul.f32 %v49, %v63
    %v66 = vmul.f32 %v50, %v64
    %v68 = vlaneseq
    %v69 = vshrl.u32 %v68, 7
    %v70 = vsub.s32 0, %v69
    %v71 = vrot.slane %v37, %v70
    %v73 = vmul.f32 %v65, %v71
    %v74 = vmul.f32 %v66, %v71
    %v76 = vlaneseq
    %v77 = vshrl.u32 %v76, 7
    %v78 = vsub.s32 0, %v77
    %v79 = vrot.slane %v38, %v78
    %v81 = vadd.f32 %v73, %v79
    %v82 = vadd.f32 %v74, %v79
    %v83 = vpack.c.bf16 %v82, %v81
    %v84 = vld [vmem:[#allocation2] sm:$0xf]
    %v85 = vld [vmem:[#allocation2 + $0x4] sm:$0xf]
    %v86 = vld [vmem:[#allocation2 + $0x8] sm:$0xf]
    %v87 = vld [vmem:[#allocation2 + $0xc] sm:$0xf]
    %v88 = vld [vmem:[%s4] sm:$0x1]
    %v90 = vlaneseq
    %v91 = vshrl.u32 %v90, 7
    %v92 = vsub.s32 0, %v91
    %v93 = vrot.slane %v88, %v92
    %v99 = vunpack.c.l.b16 %v84
    %v100 = vunpack.c.l.b16 %v85
    %v101 = vunpack.c.l.b16 %v86
    %v102 = vunpack.c.l.b16 %v87
    %v103 = vpack.c.b16 %v100, %v99
    %v104 = vpack.c.b16 %v102, %v101
    %v108 = vsel %vm39, %v83, 0
    %110 = vmatprep.subr.bf16.mxu0 0
    %111 = vmatpush1.bf16.msra.mxu0 0
    %112 = vmatprep.subr.bf16.mxu0 0
    %113 = vmatpush1.bf16.msra.mxu0 0
    %114 = vmatprep.subr.bf16.mxu0 0
    %115 = vmatpush1.bf16.msra.mxu0 0
    %116 = vmatprep.subr.bf16.mxu0 0
    %117 = vmatpush1.bf16.msra.mxu0 0
    %118 = vmatprep.subr.bf16.mxu0 0
    %119 = vmatpush1.bf16.msra.mxu0 0
    %120 = vmatprep.subr.bf16.mxu0 0
    %121 = vmatpush1.bf16.msra.mxu0 0
    %122 = vmatprep.subr.bf16.mxu0 0
    %123 = vmatpush1.bf16.msra.mxu0 %v104
    %124 = vmatprep.subr.bf16.mxu0 0
    %125 = vmatpush1.bf16.msra.mxu0 %v103
    %126 = vmatprep.subr.bf16.mxu0 0
    %127 = vmatpush2.bf16.msra.mxu0 0
    %128 = vmatprep.subr.bf16.mxu0 0
    %129 = vmatpush2.bf16.msra.mxu0 0
    %130 = vmatprep.subr.bf16.mxu0 0
    %131 = vmatpush2.bf16.msra.mxu0 0
    %132 = vmatprep.subr.bf16.mxu0 0
    %133 = vmatpush2.bf16.msra.mxu0 0
    %134 = vmatprep.subr.bf16.mxu0 0
    %135 = vmatpush2.bf16.msra.mxu0 0
    %136 = vmatprep.subr.bf16.mxu0 0
    %137 = vmatpush2.bf16.msra.mxu0 0
    %138 = vmatprep.subr.bf16.mxu0 0
    %139 = vmatpush2.bf16.msra.mxu0 0
    %140 = vmatprep.subr.bf16.mxu0 0
    %141 = vmatpush2.bf16.msra.mxu0 0
    %142 = vmatprep.mubr.bf16.mxu0 0
    %143 = vmatmul.mubr.bf16.gmra.mxu0 %v108
    %v144 = vpop.f32.mrf.mxu0
    %v145 = vadd.f32 %v93, %v144
    %v146 = vpop.f32.mrf.mxu0
    %v147 = vpop.f32.mrf.mxu0
    %v148 = vadd.f32 %v93, %v147
    %v149 = vpop.f32.mrf.mxu0
    %150 = vdwg.mxu0
    %vm151 = vcmask 785408
    %152 = vst.msk [vmem:[%s5] sm:$0xff] %vm151, %v145
    %153 = vst.msk [vmem:[%s5 + $0x8] sm:$0xff] %vm151, %v148
    // Predicated region
    $region26: #{block_forward.3} parent=1 // pred_check
      _
    $region27: #{block_forward.3} parent=1 // pred_check_branch
      %155 = sbr.rel (0) target = $region29
    $region28: #{block_forward.3} parent=1 // pred_region
      _
    $region29: #{block_forward.3} parent=1 // pred_fallthru
      _
    // Predicated region
    $region30: #{block_forward.3} parent=1 // pred_check
      _
    $region31: #{block_forward.3} parent=1 // pred_check_branch
      %157 = sbr.rel (0) target = $region33
    $region32: #{block_forward.3} parent=1 // pred_region
      _
    $region33: #{block_forward.3} parent=1 // pred_fallthru
      _
    %158 = vsyncpa [#allocation3], 1

// kernel: block_forward.5
$region0: #{block_forward.5}
  #allocation0 [shape = 'u32[]', space=smem, size = 0x4, offset = 0x4, fixed_abs, tag = 'smem constant byte address 0x4 - core index']
  #allocation1 [shape = 'u32[144,128]{1,0:T(1,128)}', space=vmem, size = 0x12000, scoped, tag = 'internal scratch']
  %s0 = inlined_call_operand.vmem [shape: f32[16,32], index: 0, kind: input, shape index: {}]
  %s1 = inlined_call_operand.vmem [shape: f32[16,32], index: 1, kind: input, shape index: {}]
  %s2 = inlined_call_operand.vmem [shape: bf16[32,32], index: 2, kind: input, shape index: {}]
  %s3 = inlined_call_operand.vmem [shape: f32[1,32], index: 3, kind: input, shape index: {}]
  %s4 = inlined_call_operand.vmem [shape: f32[1,32], index: 4, kind: input, shape index: {}]
  %s5 = inlined_call_operand.vmem [shape: f32[1,32], index: 5, kind: input, shape index: {}]
  %s6 = inlined_call_operand.vmem [shape: bf16[32,128], index: 6, kind: input, shape index: {}]
  %s7 = inlined_call_operand.vmem [shape: f32[1,128], index: 7, kind: input, shape index: {}]
  %s8 = inlined_call_operand.vmem [shape: bf16[128,32], index: 8, kind: input, shape index: {}]
  %s9 = inlined_call_operand.vmem [shape: f32[1,32], index: 9, kind: input, shape index: {}]
  %s10 = inlined_call_operand.hbm [shape: f32[16,32], index: 10, kind: output, shape index: {}]
  %s11 = sld [smem:[#allocation0]]
  $region50: #{block_forward.5} parent=0
    _
  %s13 = ssub.s32 1, %s11
  %s14 = scalar_select 0, %s13, %s11
  $region1: #{block_forward.5} parent=0
    #allocation2 [shape = 'u8[8192]{0}', space=vmem, size = 0x2000, scoped, tag = 'output window, operand 0, single buffered']
    #allocation3 [shape = 's32[1]{0}', space=sflag, size = 0x4, scoped, tag = 'scoped memory for block_forward.5']
    %15 = vsyncpa [#allocation3], 0
    // Predicated region
    $region2: #{block_forward.5} parent=1 // pred_check
      _
    $region3: #{block_forward.5} parent=1 // pred_check_branch
      %17 = sbr.rel (0) target = $region5
    $region4: #{block_forward.5} parent=1 // pred_region
      _
    $region5: #{block_forward.5} parent=1 // pred_fallthru
      _
    // Predicated region
    $region6: #{block_forward.5} parent=1 // pred_check
      _
    $region7: #{block_forward.5} parent=1 // pred_check_branch
      %19 = sbr.rel (0) target = $region9
    $region8: #{block_forward.5} parent=1 // pred_region
      _
    $region9: #{block_forward.5} parent=1 // pred_fallthru
      _
    // Predicated region
    $region10: #{block_forward.5} parent=1 // pred_check
      _
    $region11: #{block_forward.5} parent=1 // pred_check_branch
      %21 = sbr.rel (0) target = $region13
    $region12: #{block_forward.5} parent=1 // pred_region
      _
    $region13: #{block_forward.5} parent=1 // pred_fallthru
      _
    // Predicated region
    $region14: #{block_forward.5} parent=1 // pred_check
      _
    $region15: #{block_forward.5} parent=1 // pred_check_branch
      %23 = sbr.rel (0) target = $region17
    $region16: #{block_forward.5} parent=1 // pred_region
      _
    $region17: #{block_forward.5} parent=1 // pred_fallthru
      _
    // Predicated region
    $region18: #{block_forward.5} parent=1 // pred_check
      _
    $region19: #{block_forward.5} parent=1 // pred_check_branch
      %25 = sbr.rel (0) target = $region21
    $region20: #{block_forward.5} parent=1 // pred_region
      _
    $region21: #{block_forward.5} parent=1 // pred_fallthru
      _
    // Predicated region
    $region22: #{block_forward.5} parent=1 // pred_check
      _
    $region23: #{block_forward.5} parent=1 // pred_check_branch
      %27 = sbr.rel (0) target = $region25
    $region24: #{block_forward.5} parent=1 // pred_region
      _
    $region25: #{block_forward.5} parent=1 // pred_fallthru
      _
    // Predicated region
    $region26: #{block_forward.5} parent=1 // pred_check
      _
    $region27: #{block_forward.5} parent=1 // pred_check_branch
      %29 = sbr.rel (0) target = $region29
    $region28: #{block_forward.5} parent=1 // pred_region
      _
    $region29: #{block_forward.5} parent=1 // pred_fallthru
      _
    // Predicated region
    $region30: #{block_forward.5} parent=1 // pred_check
      _
    $region31: #{block_forward.5} parent=1 // pred_check_branch
      %31 = sbr.rel (0) target = $region33
    $region32: #{block_forward.5} parent=1 // pred_region
      _
    $region33: #{block_forward.5} parent=1 // pred_fallthru
      _
    // Predicated region
    $region34: #{block_forward.5} parent=1 // pred_check
      _
    $region35: #{block_forward.5} parent=1 // pred_check_branch
      %33 = sbr.rel (0) target = $region37
    $region36: #{block_forward.5} parent=1 // pred_region
      _
    $region37: #{block_forward.5} parent=1 // pred_fallthru
      _
    // Predicated region
    $region38: #{block_forward.5} parent=1 // pred_check
      _
    $region39: #{block_forward.5} parent=1 // pred_check_branch
      %35 = sbr.rel (0) target = $region41
    $region40: #{block_forward.5} parent=1 // pred_region
      _
    $region41: #{block_forward.5} parent=1 // pred_fallthru
      _
    %v37 = vld [vmem:[%s0] sm:$0xff]
    %v38 = vld [vmem:[%s0 + $0x8] sm:$0xff]
    %v39 = vpack.c.bf16 %v38, %v37
    %v40 = vld [vmem:[%s1] sm:$0xff]
    %v41 = vld [vmem:[%s1 + $0x8] sm:$0xff]
    %v42 = vld [vmem:[%s2] sm:$0xf]
    %v43 = vld [vmem:[%s2 + $0x4] sm:$0xf]
    %v44 = vld [vmem:[%s2 + $0x8] sm:$0xf]
    %v45 = vld [vmem:[%s2 + $0xc] sm:$0xf]
    %v46 = vld [vmem:[%s3] sm:$0x1]
    %v48 = vlaneseq
    %v49 = vshrl.u32 %v48, 7
    %v50 = vsub.s32 0, %v49
    %v51 = vrot.slane %v46, %v50
    %v57 = vunpack.c.l.b16 %v42
    %v58 = vunpack.c.l.b16 %v43
    %v59 = vunpack.c.l.b16 %v44
    %v60 = vunpack.c.l.b16 %v45
    %v61 = vpack.c.b16 %v58, %v57
    %v62 = vpack.c.b16 %v60, %v59
    %vm65 = vcmask 261120
    %v67 = vsel %vm65, %v39, 0
    %69 = vmatprep.subr.bf16.mxu0 0
    %70 = vmatpush1.bf16.msra.mxu0 0
    %71 = vmatprep.subr.bf16.mxu0 0
    %72 = vmatpush1.bf16.msra.mxu0 0
    %73 = vmatprep.subr.bf16.mxu0 0
    %74 = vmatpush1.bf16.msra.mxu0 0
    %75 = vmatprep.subr.bf16.mxu0 0
    %76 = vmatpush1.bf16.msra.mxu0 0
    %77 = vmatprep.subr.bf16.mxu0 0
    %78 = vmatpush1.bf16.msra.mxu0 0
    %79 = vmatprep.subr.bf16.mxu0 0
    %80 = vmatpush1.bf16.msra.mxu0 0
    %81 = vmatprep.subr.bf16.mxu0 0
    %82 = vmatpush1.bf16.msra.mxu0 %v62
    %83 = vmatprep.subr.bf16.mxu0 0
    %84 = vmatpush1.bf16.msra.mxu0 %v61
    %85 = vmatprep.subr.bf16.mxu0 0
    %86 = vmatpush2.bf16.msra.mxu0 0
    %87 = vmatprep.subr.bf16.mxu0 0
    %88 = vmatpush2.bf16.msra.mxu0 0
    %89 = vmatprep.subr.bf16.mxu0 0
    %90 = vmatpush2.bf16.msra.mxu0 0
    %91 = vmatprep.subr.bf16.mxu0 0
    %92 = vmatpush2.bf16.msra.mxu0 0
    %93 = vmatprep.subr.bf16.mxu0 0
    %94 = vmatpush2.bf16.msra.mxu0 0
    %95 = vmatprep.subr.bf16.mxu0 0
    %96 = vmatpush2.bf16.msra.mxu0 0
    %97 = vmatprep.subr.bf16.mxu0 0
    %98 = vmatpush2.bf16.msra.mxu0 0
    %99 = vmatprep.subr.bf16.mxu0 0
    %100 = vmatpush2.bf16.msra.mxu0 0
    %101 = vmatprep.mubr.bf16.mxu0 0
    %102 = vmatmul.mubr.bf16.gmra.mxu0 %v67
    %v103 = vpop.f32.mrf.mxu0
    %v104 = vadd.f32 %v51, %v103
    %v105 = vpop.f32.mrf.mxu0
    %v106 = vpop.f32.mrf.mxu0
    %v107 = vadd.f32 %v51, %v106
    %v108 = vpop.f32.mrf.mxu0
    %109 = vdwg.mxu0
    %v110 = vadd.f32 %v40, %v104
    %v111 = vadd.f32 %v41, %v107
    %v112 = vld [vmem:[%s4] sm:$0x1]
    %v113 = vld [vmem:[%s5] sm:$0x1]
    %v114 = vsel %vm65, %v110, 0.0
    %115 = vadd.xlane.f32.xlu0 %v114
    %v116 = vpop.xlane.xlu0 %115
    %v117 = vsel %vm65, %v111, 0.0
    %118 = vadd.xlane.f32.xlu0 %v117
    %v119 = vpop.xlane.xlu0 %118
    %v120 = vrcp.pop 32.0
    %v121 = vmul.f32 %v116, %v120
    %v122 = vmul.f32 %v119, %v120
    %v123 = vsub.f32 %v110, %v121
    %v124 = vsub.f32 %v111, %v122
    %v125 = vmul.f32 %v123, %v123
    %v126 = vmul.f32 %v124, %v124
    %v127 = vsel %vm65, %v125, 0.0
    %128 = vadd.xlane.f32.xlu0 %v127
    %v129 = vpop.xlane.xlu0 %128
    %v130 = vsel %vm65, %v126, 0.0
    %131 = vadd.xlane.f32.xlu0 %v130
    %v132 = vpop.xlane.xlu0 %131
    %v133 = vmul.f32 %v129, %v120
    %v134 = vmul.f32 %v132, %v120
    %v135 = vadd.f32 %v133, 1e-05
    %v136 = vadd.f32 %v134, 1e-05
    %v137 = vrsqrt.pop %v135
    %v138 = vrsqrt.pop %v136
    %v139 = vmul.f32 %v123, %v137
    %v140 = vmul.f32 %v124, %v138
    %v142 = vlaneseq
    %v143 = vshrl.u32 %v142, 7
    %v144 = vsub.s32 0, %v143
    %v145 = vrot.slane %v112, %v144
    %v147 = vmul.f32 %v139, %v145
    %v148 = vmul.f32 %v140, %v145
    %v150 = vlaneseq
    %v151 = vshrl.u32 %v150, 7
    %v152 = vsub.s32 0, %v151
    %v153 = vrot.slane %v113, %v152
    %v155 = vadd.f32 %v147, %v153
    %v156 = vadd.f32 %v148, %v153
    %v157 = vpack.c.bf16 %v156, %v155
    %v158 = vld [vmem:[%s6] sm:$0xf]
    %v159 = vld [vmem:[%s6 + $0x4] sm:$0xf]
    %v160 = vld [vmem:[%s6 + $0x8] sm:$0xf]
    %v161 = vld [vmem:[%s6 + $0xc] sm:$0xf]
    %v162 = vld [vmem:[%s7] sm:$0x1]
    %v164 = vlaneseq
    %v165 = vshrl.u32 %v164, 7
    %v166 = vsub.s32 0, %v165
    %v167 = vrot.slane %v162, %v166
    %v173 = vunpack.c.l.b16 %v158
    %v174 = vunpack.c.l.b16 %v159
    %v175 = vunpack.c.l.b16 %v160
    %v176 = vunpack.c.l.b16 %v161
    %v177 = vpack.c.b16 %v174, %v173
    %v178 = vpack.c.b16 %v176, %v175
    %v182 = vsel %vm65, %v157, 0
    %184 = vmatprep.subr.bf16.mxu0 0
    %185 = vmatpush1.bf16.msra.mxu0 0
    %186 = vmatprep.subr.bf16.mxu0 0
    %187 = vmatpush1.bf16.msra.mxu0 0
    %188 = vmatprep.subr.bf16.mxu0 0
    %189 = vmatpush1.bf16.msra.mxu0 0
    %190 = vmatprep.subr.bf16.mxu0 0
    %191 = vmatpush1.bf16.msra.mxu0 0
    %192 = vmatprep.subr.bf16.mxu0 0
    %193 = vmatpush1.bf16.msra.mxu0 0
    %194 = vmatprep.subr.bf16.mxu0 0
    %195 = vmatpush1.bf16.msra.mxu0 0
    %196 = vmatprep.subr.bf16.mxu0 0
    %197 = vmatpush1.bf16.msra.mxu0 %v178
    %198 = vmatprep.subr.bf16.mxu0 0
    %199 = vmatpush1.bf16.msra.mxu0 %v177
    %200 = vmatprep.subr.bf16.mxu0 0
    %201 = vmatpush2.bf16.msra.mxu0 0
    %202 = vmatprep.subr.bf16.mxu0 0
    %203 = vmatpush2.bf16.msra.mxu0 0
    %204 = vmatprep.subr.bf16.mxu0 0
    %205 = vmatpush2.bf16.msra.mxu0 0
    %206 = vmatprep.subr.bf16.mxu0 0
    %207 = vmatpush2.bf16.msra.mxu0 0
    %208 = vmatprep.subr.bf16.mxu0 0
    %209 = vmatpush2.bf16.msra.mxu0 0
    %210 = vmatprep.subr.bf16.mxu0 0
    %211 = vmatpush2.bf16.msra.mxu0 0
    %212 = vmatprep.subr.bf16.mxu0 0
    %213 = vmatpush2.bf16.msra.mxu0 0
    %214 = vmatprep.subr.bf16.mxu0 0
    %215 = vmatpush2.bf16.msra.mxu0 0
    %216 = vmatprep.mubr.bf16.mxu0 0
    %217 = vmatmul.mubr.bf16.gmra.mxu0 %v182
    %v218 = vpop.f32.mrf.mxu0
    %v219 = vadd.f32 %v167, %v218
    %v220 = vpop.f32.mrf.mxu0
    %v221 = vpop.f32.mrf.mxu0
    %v222 = vadd.f32 %v167, %v221
    %v223 = vpop.f32.mrf.mxu0
    %224 = vdwg.mxu0
    %v225 = vmul.f32 %v219, 0.5
    %v226 = vmul.f32 %v222, 0.5
    %v227 = vmul.f32 %v219, %v219
    %v228 = vmul.f32 %v222, %v222
    %v229 = vmul.f32 %v219, %v227
    %v230 = vmul.f32 %v222, %v228
    %v231 = vmul.f32 %v229, 0.044715
    %v232 = vmul.f32 %v230, 0.044715
    %v233 = vadd.f32 %v219, %v231
    %v234 = vadd.f32 %v222, %v232
    %v235 = vmul.f32 %v233, 0.7978846
    %v236 = vmul.f32 %v234, 0.7978846
    %v237 = vtanh.pop %v235
    %v238 = vtanh.pop %v236
    %v239 = vadd.f32 %v237, 1.0
    %v240 = vadd.f32 %v238, 1.0
    %v241 = vmul.f32 %v225, %v239
    %v242 = vmul.f32 %v226, %v240
    %v243 = vpack.c.bf16 %v242, %v241
    %v244 = vld [vmem:[%s8] sm:$0xf]
    %v245 = vld [vmem:[%s8 + $0x4] sm:$0xf]
    %v246 = vld [vmem:[%s8 + $0x8] sm:$0xf]
    %v247 = vld [vmem:[%s8 + $0xc] sm:$0xf]
    %v248 = vld [vmem:[%s8 + $0x10] sm:$0xf]
    %v249 = vld [vmem:[%s8 + $0x14] sm:$0xf]
    %v250 = vld [vmem:[%s8 + $0x18] sm:$0xf]
    %v251 = vld [vmem:[%s8 + $0x1c] sm:$0xf]
    %v252 = vld [vmem:[%s8 + $0x20] sm:$0xf]
    %v253 = vld [vmem:[%s8 + $0x24] sm:$0xf]
    %v254 = vld [vmem:[%s8 + $0x28] sm:$0xf]
    %v255 = vld [vmem:[%s8 + $0x2c] sm:$0xf]
    %v256 = vld [vmem:[%s8 + $0x30] sm:$0xf]
    %v257 = vld [vmem:[%s8 + $0x34] sm:$0xf]
    %v258 = vld [vmem:[%s8 + $0x38] sm:$0xf]
    %v259 = vld [vmem:[%s8 + $0x3c] sm:$0xf]
    %v260 = vld [vmem:[%s9] sm:$0x1]
    %v262 = vlaneseq
    %v263 = vshrl.u32 %v262, 7
    %v264 = vsub.s32 0, %v263
    %v265 = vrot.slane %v260, %v264
    %v283 = vunpack.c.l.b16 %v244
    %v284 = vunpack.c.l.b16 %v245
    %v285 = vunpack.c.l.b16 %v246
    %v286 = vunpack.c.l.b16 %v247
    %v287 = vunpack.c.l.b16 %v248
    %v288 = vunpack.c.l.b16 %v249
    %v289 = vunpack.c.l.b16 %v250
    %v290 = vunpack.c.l.b16 %v251
    %v291 = vunpack.c.l.b16 %v252
    %v292 = vunpack.c.l.b16 %v253
    %v293 = vunpack.c.l.b16 %v254
    %v294 = vunpack.c.l.b16 %v255
    %v295 = vunpack.c.l.b16 %v256
    %v296 = vunpack.c.l.b16 %v257
    %v297 = vunpack.c.l.b16 %v258
    %v298 = vunpack.c.l.b16 %v259
    %v299 = vpack.c.b16 %v284, %v283
    %v300 = vpack.c.b16 %v286, %v285
    %v301 = vpack.c.b16 %v288, %v287
    %v302 = vpack.c.b16 %v290, %v289
    %v303 = vpack.c.b16 %v292, %v291
    %v304 = vpack.c.b16 %v294, %v293
    %v305 = vpack.c.b16 %v296, %v295
    %v306 = vpack.c.b16 %v298, %v297
    %315 = vmatprep.subr.bf16.mxu0 0
    %316 = vmatpush1.bf16.msra.mxu0 %v306
    %317 = vmatprep.subr.bf16.mxu0 0
    %318 = vmatpush1.bf16.msra.mxu0 %v305
    %319 = vmatprep.subr.bf16.mxu0 0
    %320 = vmatpush1.bf16.msra.mxu0 %v304
    %321 = vmatprep.subr.bf16.mxu0 0
    %322 = vmatpush1.bf16.msra.mxu0 %v303
    %323 = vmatprep.subr.bf16.mxu0 0
    %324 = vmatpush1.bf16.msra.mxu0 %v302
    %325 = vmatprep.subr.bf16.mxu0 0
    %326 = vmatpush1.bf16.msra.mxu0 %v301
    %327 = vmatprep.subr.bf16.mxu0 0
    %328 = vmatpush1.bf16.msra.mxu0 %v300
    %329 = vmatprep.subr.bf16.mxu0 0
    %330 = vmatpush1.bf16.msra.mxu0 %v299
    %331 = vmatprep.subr.bf16.mxu0 0
    %332 = vmatpush2.bf16.msra.mxu0 0
    %333 = vmatprep.subr.bf16.mxu0 0
    %334 = vmatpush2.bf16.msra.mxu0 0
    %335 = vmatprep.subr.bf16.mxu0 0
    %336 = vmatpush2.bf16.msra.mxu0 0
    %337 = vmatprep.subr.bf16.mxu0 0
    %338 = vmatpush2.bf16.msra.mxu0 0
    %339 = vmatprep.subr.bf16.mxu0 0
    %340 = vmatpush2.bf16.msra.mxu0 0
    %341 = vmatprep.subr.bf16.mxu0 0
    %342 = vmatpush2.bf16.msra.mxu0 0
    %343 = vmatprep.subr.bf16.mxu0 0
    %344 = vmatpush2.bf16.msra.mxu0 0
    %345 = vmatprep.subr.bf16.mxu0 0
    %346 = vmatpush2.bf16.msra.mxu0 0
    %347 = vmatprep.mubr.bf16.mxu0 0
    %348 = vmatmul.mubr.bf16.gmra.mxu0 %v243
    %v349 = vpop.f32.mrf.mxu0
    %v350 = vadd.f32 %v265, %v349
    %v351 = vpop.f32.mrf.mxu0
    %v352 = vpop.f32.mrf.mxu0
    %v353 = vadd.f32 %v265, %v352
    %v354 = vpop.f32.mrf.mxu0
    %355 = vdwg.mxu0
    %v356 = vadd.f32 %v110, %v350
    %v357 = vadd.f32 %v111, %v353
    %358 = vst.msk [vmem:[#allocation2] sm:$0xff] %vm65, %v356
    %359 = vst.msk [vmem:[#allocation2 + $0x8] sm:$0xff] %vm65, %v357
    // Predicated region
    $region42: #{block_forward.5} parent=1 // pred_check
      _
    $region43: #{block_forward.5} parent=1 // pred_check_branch
      %361 = sbr.rel (0) target = $region45
    $region44: #{block_forward.5} parent=1 // pred_region
      %s363 = ssub.s32 256, 256
      %364 = vsyncadd [#allocation3], %s363
      %s365 = sshll.u32 [#allocation2], 4
      %s366 = int_to_ptr.vmem [resolvable:$true] %s365
      %371 = dma.vmem_to_hbm [thread:$0]  %s366, 256, %s10, [#allocation3], 128, 128, 8
    $region45: #{block_forward.5} parent=1 // pred_fallthru
      _
    // Predicated region
    $region46: #{block_forward.5} parent=1 // pred_check
      _
    $region47: #{block_forward.5} parent=1 // pred_check_branch
      %373 = sbr.rel (0) target = $region49
    $region48: #{block_forward.5} parent=1 // pred_region
      %374 = dma.done [#allocation3], 256
    $region49: #{block_forward.5} parent=1 // pred_fallthru
      _
    %375 = vsyncpa [#allocation3], 1

</llo_original>
